<compile_context>
chip_gen: v7x
topology: tpu7x:2x2x1
jax: 0.10.0
libtpu: 0.0.40
codegen_flags: <defaults>
</compile_context>

<pallas_src>
import functools
import math

import jax
import jax.numpy as jnp
from jax import lax
from jax.experimental import pallas as pl
from jax.experimental.pallas import tpu as pltpu

# ---------------- demo config (small, consistent with the module) ----------------
BATCH = 2
CHANNELS = 32        # normalization(channels) == GroupNorm(32, channels)
NUM_GROUPS = 32
NUM_HEADS = 4
HW = 8               # spatial 8x8 -> T = 64, so B*T = 128 (lane-dense)
EPS = 1e-5


def attention_block_kernel(x_ref, wqkv_ref, bqkv_ref, wproj_ref, bproj_ref,
                           mask_ref, *rest, num_heads, cpg, t):
    # Trailing refs: optional gpool (only when channels_per_group > 1), then output.
    if cpg > 1:
        gpool_ref, o_ref = rest
    else:
        gpool_ref, o_ref = None, rest[0]

    x = x_ref[...]                                   # (C, B*T) f32, lanes batch-major
    c, bt = x.shape
    ch = c // num_heads                              # channels per head
    mask01 = mask_ref[...]                           # (B*T, B*T) 1.0 if same batch else 0.0

    # ---- GroupNorm(num_groups, C): per-(group, batch) statistics ----
    # One fused MXU matmul gives per-channel per-batch sums of x and x^2
    # broadcast back over that batch's lanes; scale by 1/T on the tiny result.
    # (Single-pass E[x^2]-E[x]^2 variance: fine for this data, see review notes.)
    xx = jnp.concatenate([x, x * x], axis=0)                         # (2C, B*T)
    stats = jnp.dot(xx, mask01,
                    preferred_element_type=jnp.float32) * (1.0 / t)  # (2C, B*T)
    ex, ex2 = stats[:c, :], stats[c:, :]
    if cpg > 1:
        gpool = gpool_ref[...]                       # (C, C), 1/cpg if same group
        ex = jnp.dot(gpool, ex, preferred_element_type=jnp.float32)
        ex2 = jnp.dot(gpool, ex2, preferred_element_type=jnp.float32)
    var = ex2 - ex * ex
    normed = (x - ex) * lax.rsqrt(var + EPS)         # (C, B*T); affine folded into w_qkv

    # ---- qkv 1x1 conv: (3C, C) @ (C, B*T) + bias ----
    # gamma/beta and the 1/sqrt(ch) k-scale are already folded into these weights.
    qkv = jnp.dot(wqkv_ref[...], normed,
                  preferred_element_type=jnp.float32) + bqkv_ref[...]  # (3C, B*T)

    # ---- multi-head QKV attention, all heads in two batched dot_generals ----
    # Channel layout after the module's reshape(b*H, 3*ch, T): head h owns conv
    # output channels [h*3ch, (h+1)*3ch) as contiguous [q | k | v] blocks.
    qkv_h = qkv.reshape(num_heads, 3 * ch, bt)       # (H, 3ch, B*T), tile-aligned view
    q = qkv_h[:, 0:ch, :]                            # (H, ch, B*T)
    k = qkv_h[:, ch:2 * ch, :]                       # (H, ch, B*T), pre-scaled by 1/sqrt(ch)
    v = qkv_h[:, 2 * ch:3 * ch, :]                   # (H, ch, B*T)
    q_t = jnp.swapaxes(q, 1, 2)                      # (H, B*T, ch)  small transpose, no scale

    # logits[h, i, j] = sum_c q[h,c,i] * k[h,c,j]   (standard batched (M,K)x(K,N))
    logits = lax.dot_general(q_t, k,
                             dimension_numbers=(((2,), (1,)), ((0,), (0,))),
                             preferred_element_type=jnp.float32)     # (H, B*T, B*T)

    # Rowmax over unmasked logits is a valid stabilizer; mask after the exp.
    m = jnp.max(logits, axis=-1, keepdims=True)
    p = jnp.exp(logits - m) * mask01                                 # (H, B*T, B*T)

    # ---- V.P on the MXU, with ones rows appended so it also emits the softmax
    # denominator (row `ch`) in query-on-lanes layout (trans-B batched matmul).
    pad = 8                                          # ch + pad = 16 sublanes, tile-aligned
    v_ext = jnp.concatenate(
        [v, jnp.ones((num_heads, pad, bt), jnp.float32)], axis=1)    # (H, ch+8, B*T)
    res = lax.dot_general(v_ext, p,
                          dimension_numbers=(((2,), (2,)), ((0,), (0,))),
                          preferred_element_type=jnp.float32)        # (H, ch+8, B*T)
    att = res[:, :ch, :]                                             # (H, ch, B*T)
    inv_denom = pl.reciprocal(res[:, ch:ch + 1, :], approx=True)     # (H, 1, B*T), EUP
    att = (att * inv_denom).reshape(c, bt)                           # (C, B*T)

    # ---- proj_out 1x1 conv + residual, lane-dense store ----
    # TODO(synk): at realistic sizes (C>=512, T>=1024) cast matmul operands to
    # bf16 with f32 accumulation and use 256-wide N tiles (v6e/v7x MXU), keep
    # softmax/rsqrt math in f32 on v5e, flash-tile the KV axis as a trailing
    # 'arbitrary' grid axis with online softmax sized for v7x's 64 MiB VMEM,
    # add a 'parallel' grid axis (batch/heads/q-tiles) for v7x's 2nd TensorCore,
    # and drop the wrapper-side (B,C,T)->(C,B*T) slab fold once T >= 128.
    h_out = jnp.dot(wproj_ref[...], att,
                    preferred_element_type=jnp.float32) + bproj_ref[...]
    o_ref[...] = x + h_out


def attention_block(x, gamma, beta, w_qkv, b_qkv, w_proj, b_proj,
                    *, num_heads=NUM_HEADS, num_groups=NUM_GROUPS):
    """x: (B, C, *spatial) f32 -> same shape (matches AttentionBlock._forward)."""
    b, c, *spatial = x.shape
    t = math.prod(spatial)
    bt = b * t
    cpg = c // num_groups
    ch = c // num_heads

    # --- fold GroupNorm affine + attention k-scale into the QKV conv weights ---
    # (do once per weight set; here in the wrapper since the demo runs once)
    # W' = W * gamma (per input channel), b' = W @ beta + b, then scale the k
    # output rows of both by the full 1/sqrt(ch) (q stays unscaled: equivalent).
    within = jnp.arange(3 * c, dtype=jnp.int32) % (3 * ch)
    is_k = (within >= ch) & (within < 2 * ch)
    row_scale = jnp.where(is_k, 1.0 / math.sqrt(ch), 1.0).astype(jnp.float32)
    w_eff = (w_qkv * gamma[None, :]) * row_scale[:, None]            # (3C, C)
    b_eff = (w_qkv @ beta + b_qkv) * row_scale                       # (3C,)

    # Lane-dense slab: (B, C, T) -> (C, B*T), lanes batch-major (wrapper-side
    # layout plumbing so the kernel sees >=128-wide last dims at this toy T=64).
    x_slab = jnp.transpose(x.reshape(b, c, t), (1, 0, 2)).reshape(c, bt)

    # 0/1 same-batch mask: used both as the GroupNorm batch-pooling RHS (scaled
    # by 1/T in-kernel on the small stats) and as the post-exp attention mask.
    lane_batch = jnp.arange(bt, dtype=jnp.int32) // t
    mask01 = (lane_batch[:, None] == lane_batch[None, :]).astype(jnp.float32)

    inputs = [x_slab, w_eff, b_eff.reshape(3 * c, 1),
              w_proj, b_proj.reshape(c, 1), mask01]
    in_specs = [
        pl.BlockSpec((c, bt), lambda i: (0, 0)),         # x slab
        pl.BlockSpec((3 * c, c), lambda i: (0, 0)),      # folded w_qkv
        pl.BlockSpec((3 * c, 1), lambda i: (0, 0)),      # folded b_qkv
        pl.BlockSpec((c, c), lambda i: (0, 0)),          # w_proj
        pl.BlockSpec((c, 1), lambda i: (0, 0)),          # b_proj
        pl.BlockSpec((bt, bt), lambda i: (0, 0)),        # same-batch 0/1 mask
    ]
    if cpg > 1:  # group pooling over channels only exists (and is DMA'd) when needed
        chan_group = jnp.arange(c, dtype=jnp.int32) // cpg
        gpool = (chan_group[:, None] == chan_group[None, :]).astype(jnp.float32) / float(cpg)
        inputs.append(gpool)
        in_specs.append(pl.BlockSpec((c, c), lambda i: (0, 0)))

    kernel = functools.partial(attention_block_kernel,
                               num_heads=num_heads, cpg=cpg, t=t)

    out_slab = pl.pallas_call(
        kernel,
        out_shape=jax.ShapeDtypeStruct((c, bt), jnp.float32),
        grid_spec=pltpu.PrefetchScalarGridSpec(
            num_scalar_prefetch=0,
            grid=(1,),
            in_specs=in_specs,
            out_specs=pl.BlockSpec((c, bt), lambda i: (0, 0)),  # lane-dense store
        ),
        compiler_params=pltpu.CompilerParams(
            dimension_semantics=("arbitrary",)),
    )(*inputs)

    return jnp.transpose(out_slab.reshape(c, b, t), (1, 0, 2)).reshape(b, c, *spatial)


def attention_block_reference(x, gamma, beta, w_qkv, b_qkv, w_proj, b_proj,
                              *, num_heads=NUM_HEADS, num_groups=NUM_GROUPS):
    """Pure-JAX reference mirroring the PyTorch module's forward."""
    b, c, *spatial = x.shape
    t = math.prod(spatial)
    xf = x.reshape(b, c, t)
    xg = xf.reshape(b, num_groups, (c // num_groups) * t)
    mean = jnp.mean(xg, axis=-1, keepdims=True)
    var = jnp.var(xg, axis=-1, keepdims=True)
    xn = ((xg - mean) * lax.rsqrt(var + EPS)).reshape(b, c, t)
    xn = xn * gamma[None, :, None] + beta[None, :, None]
    qkv = jnp.einsum('oc,bct->bot', w_qkv, xn) + b_qkv[None, :, None]
    ch = c // num_heads
    qkv = qkv.reshape(b * num_heads, 3 * ch, t)
    q, k, v = qkv[:, :ch], qkv[:, ch:2 * ch], qkv[:, 2 * ch:]
    scale = 1.0 / math.sqrt(math.sqrt(ch))
    w = jnp.einsum('bct,bcs->bts', q * scale, k * scale)
    w = jax.nn.softmax(w, axis=-1)
    a = jnp.einsum('bts,bcs->bct', w, v).reshape(b, c, t)
    h = jnp.einsum('oc,bct->bot', w_proj, a) + b_proj[None, :, None]
    return (xf + h).reshape(b, c, *spatial)


if __name__ == "__main__":
    key = jax.random.PRNGKey(0)
    kx, kg, kbe, kw, kb, kpw, kpb = jax.random.split(key, 7)

    # Input: (B, C, H, W) — PyTorch NCHW.
    x = jax.random.normal(kx, (BATCH, CHANNELS, HW, HW), dtype=jnp.float32)

    # Parameters (PyTorch shapes). Note: the module zero-initializes proj_out
    # (zero_module), which would make the block an exact identity; small random
    # proj weights are used here so the check exercises the full attention path.
    gamma = 1.0 + 0.1 * jax.random.normal(kg, (CHANNELS,), dtype=jnp.float32)
    beta = 0.1 * jax.random.normal(kbe, (CHANNELS,), dtype=jnp.float32)
    w_qkv = 0.05 * jax.random.normal(kw, (3 * CHANNELS, CHANNELS), dtype=jnp.float32)
    b_qkv = 0.01 * jax.random.normal(kb, (3 * CHANNELS,), dtype=jnp.float32)
    w_proj = 0.05 * jax.random.normal(kpw, (CHANNELS, CHANNELS), dtype=jnp.float32)
    b_proj = 0.01 * jax.random.normal(kpb, (CHANNELS,), dtype=jnp.float32)

    out = attention_block(x, gamma, beta, w_qkv, b_qkv, w_proj, b_proj)
    jax.block_until_ready(out)

    ref = attention_block_reference(x, gamma, beta, w_qkv, b_qkv, w_proj, b_proj)
    max_err = float(jnp.max(jnp.abs(out - ref)))

    assert out.shape == x.shape and out.dtype == jnp.float32
    assert max_err < 1e-2, f"max abs error vs reference: {max_err}"
    print("KERNEL_OK")
</pallas_src>

<mosaic_0001>
module attributes {stable_mosaic.version = 11 : i64} {
  func.func @attention_block_kernel(%arg0: i32, %arg1: memref<32x128xf32, #tpu.memory_space<vmem>>, %arg2: memref<96x32xf32, #tpu.memory_space<vmem>>, %arg3: memref<96x1xf32, #tpu.memory_space<vmem>>, %arg4: memref<32x32xf32, #tpu.memory_space<vmem>>, %arg5: memref<32x1xf32, #tpu.memory_space<vmem>>, %arg6: memref<128x128xf32, #tpu.memory_space<vmem>>, %arg7: memref<32x128xf32, #tpu.memory_space<vmem>>) attributes {dimension_semantics = [#tpu.dimension_semantics<arbitrary>], iteration_bounds = array<i64: 1>, scalar_prefetch = 0 : i64, scratch_operands = 0 : i64, tpu.core_type = #tpu.core_type<tc>, window_params = [{pipeline_mode = #tpu.pipeline_mode<synchronous>, transform_indices = @transform_0, window_bounds = array<i64: 32, 128>}, {pipeline_mode = #tpu.pipeline_mode<synchronous>, transform_indices = @transform_1, window_bounds = array<i64: 96, 32>}, {pipeline_mode = #tpu.pipeline_mode<synchronous>, transform_indices = @transform_2, window_bounds = array<i64: 96, 1>}, {pipeline_mode = #tpu.pipeline_mode<synchronous>, transform_indices = @transform_3, window_bounds = array<i64: 32, 32>}, {pipeline_mode = #tpu.pipeline_mode<synchronous>, transform_indices = @transform_4, window_bounds = array<i64: 32, 1>}, {pipeline_mode = #tpu.pipeline_mode<synchronous>, transform_indices = @transform_5, window_bounds = array<i64: 128, 128>}, {pipeline_mode = #tpu.pipeline_mode<synchronous>, transform_indices = @transform_6, window_bounds = array<i64: 32, 128>}]} {
    %c0 = arith.constant 0 : index
    %c0_0 = arith.constant 0 : index
    %0 = vector.load %arg1[%c0, %c0_0] : memref<32x128xf32, #tpu.memory_space<vmem>>, vector<32x128xf32>
    %c0_1 = arith.constant 0 : index
    %c0_2 = arith.constant 0 : index
    %1 = vector.load %arg6[%c0_1, %c0_2] : memref<128x128xf32, #tpu.memory_space<vmem>>, vector<128x128xf32>
    %2 = arith.mulf %0, %0 : vector<32x128xf32>
    %3 = tpu.concatenate %0, %2 in 0 : vector<32x128xf32>, vector<32x128xf32> -> vector<64x128xf32>
    %cst = arith.constant dense<0.000000e+00> : vector<64x128xf32>
    %4 = tpu.matmul %3, %1, %cst {dimension_numbers = #tpu.dot_dimension_numbers<[1], [0], [0], [1], [0, 0, 1, 1], [], []>} : vector<64x128xf32>, vector<128x128xf32>, vector<64x128xf32> -> vector<64x128xf32>
    %cst_3 = arith.constant 1.562500e-02 : f32
    %5 = vector.broadcast %cst_3 : f32 to vector<64x128xf32>
    %6 = arith.mulf %4, %5 : vector<64x128xf32>
    %7 = vector.extract_strided_slice %6 {offsets = [0, 0], sizes = [32, 128], strides = [1, 1]} : vector<64x128xf32> to vector<32x128xf32>
    %8 = vector.extract_strided_slice %6 {offsets = [32, 0], sizes = [32, 128], strides = [1, 1]} : vector<64x128xf32> to vector<32x128xf32>
    %9 = arith.mulf %7, %7 : vector<32x128xf32>
    %10 = arith.subf %8, %9 : vector<32x128xf32>
    %11 = arith.subf %0, %7 : vector<32x128xf32>
    %cst_4 = arith.constant 9.99999974E-6 : f32
    %12 = vector.broadcast %cst_4 : f32 to vector<32x128xf32>
    %13 = arith.addf %10, %12 : vector<32x128xf32>
    %14 = math.rsqrt %13 : vector<32x128xf32>
    %15 = arith.mulf %11, %14 : vector<32x128xf32>
    %c0_5 = arith.constant 0 : index
    %c0_6 = arith.constant 0 : index
    %16 = vector.load %arg2[%c0_5, %c0_6] : memref<96x32xf32, #tpu.memory_space<vmem>>, vector<96x32xf32>
    %cst_7 = arith.constant dense<0.000000e+00> : vector<96x128xf32>
    %17 = tpu.matmul %16, %15, %cst_7 {dimension_numbers = #tpu.dot_dimension_numbers<[1], [0], [0], [1], [0, 0, 1, 1], [], []>} : vector<96x32xf32>, vector<32x128xf32>, vector<96x128xf32> -> vector<96x128xf32>
    %c0_8 = arith.constant 0 : index
    %c0_9 = arith.constant 0 : index
    %18 = vector.load %arg3[%c0_8, %c0_9] : memref<96x1xf32, #tpu.memory_space<vmem>>, vector<96x1xf32>
    %19 = vector.broadcast %18 : vector<96x1xf32> to vector<96x128xf32>
    %20 = arith.addf %17, %19 : vector<96x128xf32>
    %21 = vector.shape_cast %20 : vector<96x128xf32> to vector<4x24x128xf32>
    %22 = vector.extract_strided_slice %21 {offsets = [0, 0, 0], sizes = [4, 8, 128], strides = [1, 1, 1]} : vector<4x24x128xf32> to vector<4x8x128xf32>
    %23 = vector.extract_strided_slice %21 {offsets = [0, 8, 0], sizes = [4, 8, 128], strides = [1, 1, 1]} : vector<4x24x128xf32> to vector<4x8x128xf32>
    %24 = vector.extract_strided_slice %21 {offsets = [0, 16, 0], sizes = [4, 8, 128], strides = [1, 1, 1]} : vector<4x24x128xf32> to vector<4x8x128xf32>
    %25 = tpu.transpose %22, [0, 2, 1] : vector<4x8x128xf32> -> vector<4x128x8xf32>
    %cst_10 = arith.constant dense<0.000000e+00> : vector<4x128x128xf32>
    %26 = tpu.matmul %25, %23, %cst_10 {dimension_numbers = #tpu.dot_dimension_numbers<[2], [1], [1], [2], [0, 0, 0, 1, 1, 2], [0], [0]>} : vector<4x128x8xf32>, vector<4x8x128xf32>, vector<4x128x128xf32> -> vector<4x128x128xf32>
    %cst_11 = arith.constant dense<0xFF800000> : vector<4x128xf32>
    %27 = vector.multi_reduction <maximumf>, %26, %cst_11 [2] : vector<4x128x128xf32> to vector<4x128xf32>
    %28 = vector.shape_cast %27 : vector<4x128xf32> to vector<4x128x1xf32>
    %29 = vector.broadcast %28 : vector<4x128x1xf32> to vector<4x128x128xf32>
    %30 = arith.subf %26, %29 : vector<4x128x128xf32>
    %31 = math.exp %30 : vector<4x128x128xf32>
    %32 = vector.shape_cast %1 : vector<128x128xf32> to vector<1x128x128xf32>
    %33 = vector.broadcast %32 : vector<1x128x128xf32> to vector<4x128x128xf32>
    %34 = arith.mulf %31, %33 : vector<4x128x128xf32>
    %cst_12 = arith.constant 1.000000e+00 : f32
    %35 = vector.broadcast %cst_12 : f32 to vector<4x8x128xf32>
    %36 = tpu.concatenate %24, %35 in 1 : vector<4x8x128xf32>, vector<4x8x128xf32> -> vector<4x16x128xf32>
    %cst_13 = arith.constant dense<0.000000e+00> : vector<4x16x128xf32>
    %37 = tpu.matmul %36, %34, %cst_13 {dimension_numbers = #tpu.dot_dimension_numbers<[2], [2], [1], [1], [0, 0, 0, 1, 1, 1], [0], [0]>} : vector<4x16x128xf32>, vector<4x128x128xf32>, vector<4x16x128xf32> -> vector<4x16x128xf32>
    %38 = vector.extract_strided_slice %37 {offsets = [0, 0, 0], sizes = [4, 8, 128], strides = [1, 1, 1]} : vector<4x16x128xf32> to vector<4x8x128xf32>
    %39 = vector.extract_strided_slice %37 {offsets = [0, 8, 0], sizes = [4, 1, 128], strides = [1, 1, 1]} : vector<4x16x128xf32> to vector<4x1x128xf32>
    %40 = tpu.reciprocal %39 {approx = true} : vector<4x1x128xf32> -> vector<4x1x128xf32>
    %41 = vector.broadcast %40 : vector<4x1x128xf32> to vector<4x8x128xf32>
    %42 = arith.mulf %38, %41 : vector<4x8x128xf32>
    %43 = vector.shape_cast %42 : vector<4x8x128xf32> to vector<32x128xf32>
    %c0_14 = arith.constant 0 : index
    %c0_15 = arith.constant 0 : index
    %44 = vector.load %arg4[%c0_14, %c0_15] : memref<32x32xf32, #tpu.memory_space<vmem>>, vector<32x32xf32>
    %cst_16 = arith.constant dense<0.000000e+00> : vector<32x128xf32>
    %45 = tpu.matmul %44, %43, %cst_16 {dimension_numbers = #tpu.dot_dimension_numbers<[1], [0], [0], [1], [0, 0, 1, 1], [], []>} : vector<32x32xf32>, vector<32x128xf32>, vector<32x128xf32> -> vector<32x128xf32>
    %c0_17 = arith.constant 0 : index
    %c0_18 = arith.constant 0 : index
    %46 = vector.load %arg5[%c0_17, %c0_18] : memref<32x1xf32, #tpu.memory_space<vmem>>, vector<32x1xf32>
    %47 = vector.broadcast %46 : vector<32x1xf32> to vector<32x128xf32>
    %48 = arith.addf %45, %47 : vector<32x128xf32>
    %49 = arith.addf %0, %48 : vector<32x128xf32>
    %c0_19 = arith.constant 0 : index
    %c0_20 = arith.constant 0 : index
    %50 = vector.load %arg7[%c0_19, %c0_20] : memref<32x128xf32, #tpu.memory_space<vmem>>, vector<32x128xf32>
    tpu.vector_store %arg7[%c0_19, %c0_20], %49 {strides = array<i32>} : memref<32x128xf32, #tpu.memory_space<vmem>>, vector<32x128xf32>,
    return
  }
  func.func @transform_0(%arg0: i32) -> (i32, i32) {
    %c0_i32 = arith.constant 0 : i32
    %c0_i32_0 = arith.constant 0 : i32
    %c0_i32_1 = arith.constant 0 : i32
    return %c0_i32, %c0_i32_0 : i32, i32
  }
  func.func @transform_1(%arg0: i32) -> (i32, i32) {
    %c0_i32 = arith.constant 0 : i32
    %c0_i32_0 = arith.constant 0 : i32
    %c0_i32_1 = arith.constant 0 : i32
    return %c0_i32, %c0_i32_0 : i32, i32
  }
  func.func @transform_2(%arg0: i32) -> (i32, i32) {
    %c0_i32 = arith.constant 0 : i32
    %c0_i32_0 = arith.constant 0 : i32
    %c0_i32_1 = arith.constant 0 : i32
    return %c0_i32, %c0_i32_0 : i32, i32
  }
  func.func @transform_3(%arg0: i32) -> (i32, i32) {
    %c0_i32 = arith.constant 0 : i32
    %c0_i32_0 = arith.constant 0 : i32
    %c0_i32_1 = arith.constant 0 : i32
    return %c0_i32, %c0_i32_0 : i32, i32
  }
  func.func @transform_4(%arg0: i32) -> (i32, i32) {
    %c0_i32 = arith.constant 0 : i32
    %c0_i32_0 = arith.constant 0 : i32
    %c0_i32_1 = arith.constant 0 : i32
    return %c0_i32, %c0_i32_0 : i32, i32
  }
  func.func @transform_5(%arg0: i32) -> (i32, i32) {
    %c0_i32 = arith.constant 0 : i32
    %c0_i32_0 = arith.constant 0 : i32
    %c0_i32_1 = arith.constant 0 : i32
    return %c0_i32, %c0_i32_0 : i32, i32
  }
  func.func @transform_6(%arg0: i32) -> (i32, i32) {
    %c0_i32 = arith.constant 0 : i32
    %c0_i32_0 = arith.constant 0 : i32
    %c0_i32_1 = arith.constant 0 : i32
    return %c0_i32, %c0_i32_0 : i32, i32
  }
}

</mosaic_0001>

<llo_original>
// kernel: tpu_custom_call.1
$region0: #{tpu_custom_call.1}
  #allocation0 [shape = 'u32[]', space=smem, size = 0x4, offset = 0x4, fixed_abs, tag = 'smem constant byte address 0x4 - core index']
  #allocation1 [shape = 'u32[144,128]{1,0:T(1,128)}', space=vmem, size = 0x12000, scoped, tag = 'internal scratch']
  %s0 = inlined_call_operand.vmem [shape: f32[32,128], index: 0, kind: input, shape index: {}]
  %s1 = inlined_call_operand.vmem [shape: f32[96,32], index: 1, kind: input, shape index: {}]
  %s2 = inlined_call_operand.vmem [shape: f32[96,1], index: 2, kind: input, shape index: {}]
  %s3 = inlined_call_operand.vmem [shape: f32[32,32], index: 3, kind: input, shape index: {}]
  %s4 = inlined_call_operand.vmem [shape: f32[32,1], index: 4, kind: input, shape index: {}]
  %s5 = inlined_call_operand.vmem [shape: f32[128,128], index: 5, kind: input, shape index: {}]
  %s6 = inlined_call_operand.hbm [shape: f32[32,128], index: 6, kind: output, shape index: {}]
  %s7 = sld [smem:[#allocation0]]
  $region34: #{tpu_custom_call.1} parent=0
    _
  %s9 = ssub.s32 1, %s7
  %s10 = scalar_select 0, %s9, %s7
  $region1: #{tpu_custom_call.1} parent=0
    #allocation2 [shape = 'u8[16384]{0}', space=vmem, size = 0x4000, scoped, tag = 'output window, operand 0, single buffered']
    #allocation3 [shape = 's32[1]{0}', space=sflag, size = 0x4, scoped, tag = 'scoped memory for tpu_custom_call.1']
    %11 = vsyncpa [#allocation3], 0
    // Predicated region
    $region2: #{tpu_custom_call.1} parent=1 // pred_check
      _
    $region3: #{tpu_custom_call.1} parent=1 // pred_check_branch
      %13 = sbr.rel (0) target = $region5
    $region4: #{tpu_custom_call.1} parent=1 // pred_region
      _
    $region5: #{tpu_custom_call.1} parent=1 // pred_fallthru
      _
    // Predicated region
    $region6: #{tpu_custom_call.1} parent=1 // pred_check
      _
    $region7: #{tpu_custom_call.1} parent=1 // pred_check_branch
      %15 = sbr.rel (0) target = $region9
    $region8: #{tpu_custom_call.1} parent=1 // pred_region
      _
    $region9: #{tpu_custom_call.1} parent=1 // pred_fallthru
      _
    // Predicated region
    $region10: #{tpu_custom_call.1} parent=1 // pred_check
      _
    $region11: #{tpu_custom_call.1} parent=1 // pred_check_branch
      %17 = sbr.rel (0) target = $region13
    $region12: #{tpu_custom_call.1} parent=1 // pred_region
      _
    $region13: #{tpu_custom_call.1} parent=1 // pred_fallthru
      _
    // Predicated region
    $region14: #{tpu_custom_call.1} parent=1 // pred_check
      _
    $region15: #{tpu_custom_call.1} parent=1 // pred_check_branch
      %19 = sbr.rel (0) target = $region17
    $region16: #{tpu_custom_call.1} parent=1 // pred_region
      _
    $region17: #{tpu_custom_call.1} parent=1 // pred_fallthru
      _
    // Predicated region
    $region18: #{tpu_custom_call.1} parent=1 // pred_check
      _
    $region19: #{tpu_custom_call.1} parent=1 // pred_check_branch
      %21 = sbr.rel (0) target = $region21
    $region20: #{tpu_custom_call.1} parent=1 // pred_region
      _
    $region21: #{tpu_custom_call.1} parent=1 // pred_fallthru
      _
    // Predicated region
    $region22: #{tpu_custom_call.1} parent=1 // pred_check
      _
    $region23: #{tpu_custom_call.1} parent=1 // pred_check_branch
      %23 = sbr.rel (0) target = $region25
    $region24: #{tpu_custom_call.1} parent=1 // pred_region
      _
    $region25: #{tpu_custom_call.1} parent=1 // pred_fallthru
      _
    %v24 = vld [vmem:[%s0] sm:$0xff]
    %v25 = vld [vmem:[%s0 + $0x8] sm:$0xff]
    %v26 = vld [vmem:[%s0 + $0x10] sm:$0xff]
    %v27 = vld [vmem:[%s0 + $0x18] sm:$0xff]
    %v28 = vld [vmem:[%s5] sm:$0xff]
    %v29 = vld [vmem:[%s5 + $0x8] sm:$0xff]
    %v30 = vld [vmem:[%s5 + $0x10] sm:$0xff]
    %v31 = vld [vmem:[%s5 + $0x18] sm:$0xff]
    %v32 = vld [vmem:[%s5 + $0x20] sm:$0xff]
    %v33 = vld [vmem:[%s5 + $0x28] sm:$0xff]
    %v34 = vld [vmem:[%s5 + $0x30] sm:$0xff]
    %v35 = vld [vmem:[%s5 + $0x38] sm:$0xff]
    %v36 = vld [vmem:[%s5 + $0x40] sm:$0xff]
    %v37 = vld [vmem:[%s5 + $0x48] sm:$0xff]
    %v38 = vld [vmem:[%s5 + $0x50] sm:$0xff]
    %v39 = vld [vmem:[%s5 + $0x58] sm:$0xff]
    %v40 = vld [vmem:[%s5 + $0x60] sm:$0xff]
    %v41 = vld [vmem:[%s5 + $0x68] sm:$0xff]
    %v42 = vld [vmem:[%s5 + $0x70] sm:$0xff]
    %v43 = vld [vmem:[%s5 + $0x78] sm:$0xff]
    %v44 = vmul.f32 %v24, %v24
    %v45 = vmul.f32 %v25, %v25
    %v46 = vmul.f32 %v26, %v26
    %v47 = vmul.f32 %v27, %v27
    %48 = vmatprep.subr.mxu0 0.0
    %49 = vmatpush1.msra.mxu0 %v28
    %50 = vmatprep.subr.mxu0 0.0
    %51 = vmatpush1.msra.mxu0 %v29
    %52 = vmatprep.subr.mxu0 0.0
    %53 = vmatpush1.msra.mxu0 %v30
    %54 = vmatprep.subr.mxu0 0.0
    %55 = vmatpush1.msra.mxu0 %v31
    %56 = vmatprep.subr.mxu0 0.0
    %57 = vmatpush1.msra.mxu0 %v32
    %58 = vmatprep.subr.mxu0 0.0
    %59 = vmatpush1.msra.mxu0 %v33
    %60 = vmatprep.subr.mxu0 0.0
    %61 = vmatpush1.msra.mxu0 %v34
    %62 = vmatprep.subr.mxu0 0.0
    %63 = vmatpush1.msra.mxu0 %v35
    %64 = vmatprep.subr.mxu0 0.0
    %65 = vmatpush1.msra.mxu0 %v36
    %66 = vmatprep.subr.mxu0 0.0
    %67 = vmatpush1.msra.mxu0 %v37
    %68 = vmatprep.subr.mxu0 0.0
    %69 = vmatpush1.msra.mxu0 %v38
    %70 = vmatprep.subr.mxu0 0.0
    %71 = vmatpush1.msra.mxu0 %v39
    %72 = vmatprep.subr.mxu0 0.0
    %73 = vmatpush1.msra.mxu0 %v40
    %74 = vmatprep.subr.mxu0 0.0
    %75 = vmatpush1.msra.mxu0 %v41
    %76 = vmatprep.subr.mxu0 0.0
    %77 = vmatpush1.msra.mxu0 %v42
    %78 = vmatprep.subr.mxu0 0.0
    %79 = vmatpush1.msra.mxu0 %v43
    %80 = vmatprep.subr.mxu0 0.0
    %81 = vmatpush1.msra.mxu0 0.0
    %82 = vmatprep.subr.mxu0 0.0
    %83 = vmatpush1.msra.mxu0 0.0
    %84 = vmatprep.subr.mxu0 0.0
    %85 = vmatpush1.msra.mxu0 0.0
    %86 = vmatprep.subr.mxu0 0.0
    %87 = vmatpush1.msra.mxu0 0.0
    %88 = vmatprep.subr.mxu0 0.0
    %89 = vmatpush1.msra.mxu0 0.0
    %90 = vmatprep.subr.mxu0 0.0
    %91 = vmatpush1.msra.mxu0 0.0
    %92 = vmatprep.subr.mxu0 0.0
    %93 = vmatpush1.msra.mxu0 0.0
    %94 = vmatprep.subr.mxu0 0.0
    %95 = vmatpush1.msra.mxu0 0.0
    %96 = vmatprep.subr.mxu0 0.0
    %97 = vmatpush1.msra.mxu0 0.0
    %98 = vmatprep.subr.mxu0 0.0
    %99 = vmatpush1.msra.mxu0 0.0
    %100 = vmatprep.subr.mxu0 0.0
    %101 = vmatpush1.msra.mxu0 0.0
    %102 = vmatprep.subr.mxu0 0.0
    %103 = vmatpush1.msra.mxu0 0.0
    %104 = vmatprep.subr.mxu0 0.0
    %105 = vmatpush1.msra.mxu0 0.0
    %106 = vmatprep.subr.mxu0 0.0
    %107 = vmatpush1.msra.mxu0 0.0
    %108 = vmatprep.subr.mxu0 0.0
    %109 = vmatpush1.msra.mxu0 0.0
    %110 = vmatprep.subr.mxu0 0.0
    %111 = vmatpush1.msra.mxu0 0.0
    %112 = vmatprep.mubr.f32.mxu0 0.0
    %113 = vmatmul.mubr.f32.gmra.mrb[0].mxu0 %v24
    %v114 = vpop.f32.mrb[0].mxu0
    %v115 = vadd.f32 0.0, %v114
    %v116 = vpop.f32.mrb[0].mxu0
    %117 = vmatprep.mubr.f32.mxu0 0.0
    %118 = vmatmul.mubr.f32.gmra.mrb[0].mxu0 %v25
    %v119 = vpop.f32.mrb[0].mxu0
    %v120 = vadd.f32 0.0, %v119
    %v121 = vpop.f32.mrb[0].mxu0
    %122 = vmatprep.mubr.f32.mxu0 0.0
    %123 = vmatmul.mubr.f32.gmra.mrb[0].mxu0 %v26
    %v124 = vpop.f32.mrb[0].mxu0
    %v125 = vadd.f32 0.0, %v124
    %v126 = vpop.f32.mrb[0].mxu0
    %127 = vmatprep.mubr.f32.mxu0 0.0
    %128 = vmatmul.mubr.f32.gmra.mrb[0].mxu0 %v27
    %v129 = vpop.f32.mrb[0].mxu0
    %v130 = vadd.f32 0.0, %v129
    %v131 = vpop.f32.mrb[0].mxu0
    %132 = vmatprep.mubr.f32.mxu0 0.0
    %133 = vmatmul.mubr.f32.gmra.mrb[0].mxu0 %v44
    %v134 = vpop.f32.mrb[0].mxu0
    %v135 = vadd.f32 0.0, %v134
    %v136 = vpop.f32.mrb[0].mxu0
    %137 = vmatprep.mubr.f32.mxu0 0.0
    %138 = vmatmul.mubr.f32.gmra.mrb[0].mxu0 %v45
    %v139 = vpop.f32.mrb[0].mxu0
    %v140 = vadd.f32 0.0, %v139
    %v141 = vpop.f32.mrb[0].mxu0
    %142 = vmatprep.mubr.f32.mxu0 0.0
    %143 = vmatmul.mubr.f32.gmra.mrb[0].mxu0 %v46
    %v144 = vpop.f32.mrb[0].mxu0
    %v145 = vadd.f32 0.0, %v144
    %v146 = vpop.f32.mrb[0].mxu0
    %147 = vmatprep.mubr.f32.mxu0 0.0
    %148 = vmatmul.mubr.f32.gmra.mrb[0].mxu0 %v47
    %v149 = vpop.f32.mrb[0].mxu0
    %v150 = vadd.f32 0.0, %v149
    %v151 = vpop.f32.mrb[0].mxu0
    %152 = vdwg.mxu0
    %v153 = vmul.f32 %v115, 0.015625
    %v154 = vmul.f32 %v120, 0.015625
    %v155 = vmul.f32 %v125, 0.015625
    %v156 = vmul.f32 %v130, 0.015625
    %v157 = vmul.f32 %v135, 0.015625
    %v158 = vmul.f32 %v140, 0.015625
    %v159 = vmul.f32 %v145, 0.015625
    %v160 = vmul.f32 %v150, 0.015625
    %v161 = vmul.f32 %v153, %v153
    %v162 = vmul.f32 %v154, %v154
    %v163 = vmul.f32 %v155, %v155
    %v164 = vmul.f32 %v156, %v156
    %v165 = vsub.f32 %v157, %v161
    %v166 = vsub.f32 %v158, %v162
    %v167 = vsub.f32 %v159, %v163
    %v168 = vsub.f32 %v160, %v164
    %v169 = vsub.f32 %v24, %v153
    %v170 = vsub.f32 %v25, %v154
    %v171 = vsub.f32 %v26, %v155
    %v172 = vsub.f32 %v27, %v156
    %v173 = vadd.f32 %v165, 1e-05
    %v174 = vadd.f32 %v166, 1e-05
    %v175 = vadd.f32 %v167, 1e-05
    %v176 = vadd.f32 %v168, 1e-05
    %v177 = vrsqrt.pop %v173
    %v178 = vrsqrt.pop %v174
    %v179 = vrsqrt.pop %v175
    %v180 = vrsqrt.pop %v176
    %v181 = vmul.f32 %v169, %v177
    %v182 = vmul.f32 %v170, %v178
    %v183 = vmul.f32 %v171, %v179
    %v184 = vmul.f32 %v172, %v180
    %v185 = vld [vmem:[%s1] sm:$0xff]
    %v186 = vld [vmem:[%s1 + $0x8] sm:$0xff]
    %v187 = vld [vmem:[%s1 + $0x10] sm:$0xff]
    %v188 = vld [vmem:[%s1 + $0x18] sm:$0xff]
    %v189 = vld [vmem:[%s1 + $0x20] sm:$0xff]
    %v190 = vld [vmem:[%s1 + $0x28] sm:$0xff]
    %v191 = vld [vmem:[%s1 + $0x30] sm:$0xff]
    %v192 = vld [vmem:[%s1 + $0x38] sm:$0xff]
    %v193 = vld [vmem:[%s1 + $0x40] sm:$0xff]
    %v194 = vld [vmem:[%s1 + $0x48] sm:$0xff]
    %v195 = vld [vmem:[%s1 + $0x50] sm:$0xff]
    %v196 = vld [vmem:[%s1 + $0x58] sm:$0xff]
    %v197 = vld [vmem:[%s2] sm:$0xff]
    %v198 = vld [vmem:[%s2 + $0x8] sm:$0xff]
    %v199 = vld [vmem:[%s2 + $0x10] sm:$0xff]
    %v200 = vld [vmem:[%s2 + $0x18] sm:$0xff]
    %v201 = vld [vmem:[%s2 + $0x20] sm:$0xff]
    %v202 = vld [vmem:[%s2 + $0x28] sm:$0xff]
    %v203 = vld [vmem:[%s2 + $0x30] sm:$0xff]
    %v204 = vld [vmem:[%s2 + $0x38] sm:$0xff]
    %v205 = vld [vmem:[%s2 + $0x40] sm:$0xff]
    %v206 = vld [vmem:[%s2 + $0x48] sm:$0xff]
    %v207 = vld [vmem:[%s2 + $0x50] sm:$0xff]
    %v208 = vld [vmem:[%s2 + $0x58] sm:$0xff]
    %210 = vset.pattern.permute.xlu0 0
    %211 = vperm.xlu0 %210, %v197
    %v212 = vpop.permute.xlu0 %211
    %215 = vset.pattern.permute.xlu0 0
    %216 = vperm.xlu0 %215, %v198
    %v217 = vpop.permute.xlu0 %216
    %220 = vset.pattern.permute.xlu0 0
    %221 = vperm.xlu0 %220, %v199
    %v222 = vpop.permute.xlu0 %221
    %225 = vset.pattern.permute.xlu0 0
    %226 = vperm.xlu0 %225, %v200
    %v227 = vpop.permute.xlu0 %226
    %230 = vset.pattern.permute.xlu0 0
    %231 = vperm.xlu0 %230, %v201
    %v232 = vpop.permute.xlu0 %231
    %235 = vset.pattern.permute.xlu0 0
    %236 = vperm.xlu0 %235, %v202
    %v237 = vpop.permute.xlu0 %236
    %240 = vset.pattern.permute.xlu0 0
    %241 = vperm.xlu0 %240, %v203
    %v242 = vpop.permute.xlu0 %241
    %245 = vset.pattern.permute.xlu0 0
    %246 = vperm.xlu0 %245, %v204
    %v247 = vpop.permute.xlu0 %246
    %250 = vset.pattern.permute.xlu0 0
    %251 = vperm.xlu0 %250, %v205
    %v252 = vpop.permute.xlu0 %251
    %255 = vset.pattern.permute.xlu0 0
    %256 = vperm.xlu0 %255, %v206
    %v257 = vpop.permute.xlu0 %256
    %260 = vset.pattern.permute.xlu0 0
    %261 = vperm.xlu0 %260, %v207
    %v262 = vpop.permute.xlu0 %261
    %265 = vset.pattern.permute.xlu0 0
    %266 = vperm.xlu0 %265, %v208
    %v267 = vpop.permute.xlu0 %266
    %vm269 = vcmask 261120
    %v271 = vsel %vm269, %v185, 0
    %v274 = vsel %vm269, %v186, 0
    %v277 = vsel %vm269, %v187, 0
    %v280 = vsel %vm269, %v188, 0
    %v283 = vsel %vm269, %v189, 0
    %v286 = vsel %vm269, %v190, 0
    %v289 = vsel %vm269, %v191, 0
    %v292 = vsel %vm269, %v192, 0
    %v295 = vsel %vm269, %v193, 0
    %v298 = vsel %vm269, %v194, 0
    %v301 = vsel %vm269, %v195, 0
    %v304 = vsel %vm269, %v196, 0
    %306 = vmatprep.subr.mxu0 0.0
    %307 = vmatpush1.msra.mxu0 %v181
    %308 = vmatprep.subr.mxu0 0.0
    %309 = vmatpush1.msra.mxu0 %v182
    %310 = vmatprep.subr.mxu0 0.0
    %311 = vmatpush1.msra.mxu0 %v183
    %312 = vmatprep.subr.mxu0 0.0
    %313 = vmatpush1.msra.mxu0 %v184
    %314 = vmatprep.subr.mxu0 0.0
    %315 = vmatpush1.msra.mxu0 0.0
    %316 = vmatprep.subr.mxu0 0.0
    %317 = vmatpush1.msra.mxu0 0.0
    %318 = vmatprep.subr.mxu0 0.0
    %319 = vmatpush1.msra.mxu0 0.0
    %320 = vmatprep.subr.mxu0 0.0
    %321 = vmatpush1.msra.mxu0 0.0
    %322 = vmatprep.subr.mxu0 0.0
    %323 = vmatpush1.msra.mxu0 0.0
    %324 = vmatprep.subr.mxu0 0.0
    %325 = vmatpush1.msra.mxu0 0.0
    %326 = vmatprep.subr.mxu0 0.0
    %327 = vmatpush1.msra.mxu0 0.0
    %328 = vmatprep.subr.mxu0 0.0
    %329 = vmatpush1.msra.mxu0 0.0
    %330 = vmatprep.subr.mxu0 0.0
    %331 = vmatpush1.msra.mxu0 0.0
    %332 = vmatprep.subr.mxu0 0.0
    %333 = vmatpush1.msra.mxu0 0.0
    %334 = vmatprep.subr.mxu0 0.0
    %335 = vmatpush1.msra.mxu0 0.0
    %336 = vmatprep.subr.mxu0 0.0
    %337 = vmatpush1.msra.mxu0 0.0
    %338 = vmatprep.subr.mxu0 0.0
    %339 = vmatpush1.msra.mxu0 0.0
    %340 = vmatprep.subr.mxu0 0.0
    %341 = vmatpush1.msra.mxu0 0.0
    %342 = vmatprep.subr.mxu0 0.0
    %343 = vmatpush1.msra.mxu0 0.0
    %344 = vmatprep.subr.mxu0 0.0
    %345 = vmatpush1.msra.mxu0 0.0
    %346 = vmatprep.subr.mxu0 0.0
    %347 = vmatpush1.msra.mxu0 0.0
    %348 = vmatprep.subr.mxu0 0.0
    %349 = vmatpush1.msra.mxu0 0.0
    %350 = vmatprep.subr.mxu0 0.0
    %351 = vmatpush1.msra.mxu0 0.0
    %352 = vmatprep.subr.mxu0 0.0
    %353 = vmatpush1.msra.mxu0 0.0
    %354 = vmatprep.subr.mxu0 0.0
    %355 = vmatpush1.msra.mxu0 0.0
    %356 = vmatprep.subr.mxu0 0.0
    %357 = vmatpush1.msra.mxu0 0.0
    %358 = vmatprep.subr.mxu0 0.0
    %359 = vmatpush1.msra.mxu0 0.0
    %360 = vmatprep.subr.mxu0 0.0
    %361 = vmatpush1.msra.mxu0 0.0
    %362 = vmatprep.subr.mxu0 0.0
    %363 = vmatpush1.msra.mxu0 0.0
    %364 = vmatprep.subr.mxu0 0.0
    %365 = vmatpush1.msra.mxu0 0.0
    %366 = vmatprep.subr.mxu0 0.0
    %367 = vmatpush1.msra.mxu0 0.0
    %368 = vmatprep.subr.mxu0 0.0
    %369 = vmatpush1.msra.mxu0 0.0
    %370 = vmatprep.mubr.f32.mxu0 0.0
    %371 = vmatmul.mubr.f32.gmra.mrb[0].mxu0 %v271
    %v372 = vpop.f32.mrb[0].mxu0
    %v373 = vadd.f32 %v212, %v372
    %v374 = vpop.f32.mrb[0].mxu0
    %375 = vmatprep.mubr.f32.mxu0 0.0
    %376 = vmatmul.mubr.f32.gmra.mrb[0].mxu0 %v274
    %v377 = vpop.f32.mrb[0].mxu0
    %v378 = vadd.f32 %v217, %v377
    %v379 = vpop.f32.mrb[0].mxu0
    %380 = vmatprep.mubr.f32.mxu0 0.0
    %381 = vmatmul.mubr.f32.gmra.mrb[0].mxu0 %v277
    %v382 = vpop.f32.mrb[0].mxu0
    %v383 = vadd.f32 %v222, %v382
    %v384 = vpop.f32.mrb[0].mxu0
    %385 = vmatprep.mubr.f32.mxu0 0.0
    %386 = vmatmul.mubr.f32.gmra.mrb[0].mxu0 %v280
    %v387 = vpop.f32.mrb[0].mxu0
    %v388 = vadd.f32 %v227, %v387
    %v389 = vpop.f32.mrb[0].mxu0
    %390 = vmatprep.mubr.f32.mxu0 0.0
    %391 = vmatmul.mubr.f32.gmra.mrb[0].mxu0 %v283
    %v392 = vpop.f32.mrb[0].mxu0
    %v393 = vadd.f32 %v232, %v392
    %v394 = vpop.f32.mrb[0].mxu0
    %395 = vmatprep.mubr.f32.mxu0 0.0
    %396 = vmatmul.mubr.f32.gmra.mrb[0].mxu0 %v286
    %v397 = vpop.f32.mrb[0].mxu0
    %v398 = vadd.f32 %v237, %v397
    %v399 = vpop.f32.mrb[0].mxu0
    %400 = vmatprep.mubr.f32.mxu0 0.0
    %401 = vmatmul.mubr.f32.gmra.mrb[0].mxu0 %v289
    %v402 = vpop.f32.mrb[0].mxu0
    %v403 = vadd.f32 %v242, %v402
    %v404 = vpop.f32.mrb[0].mxu0
    %405 = vmatprep.mubr.f32.mxu0 0.0
    %406 = vmatmul.mubr.f32.gmra.mrb[0].mxu0 %v292
    %v407 = vpop.f32.mrb[0].mxu0
    %v408 = vadd.f32 %v247, %v407
    %v409 = vpop.f32.mrb[0].mxu0
    %410 = vmatprep.mubr.f32.mxu0 0.0
    %411 = vmatmul.mubr.f32.gmra.mrb[0].mxu0 %v295
    %v412 = vpop.f32.mrb[0].mxu0
    %v413 = vadd.f32 %v252, %v412
    %v414 = vpop.f32.mrb[0].mxu0
    %415 = vmatprep.mubr.f32.mxu0 0.0
    %416 = vmatmul.mubr.f32.gmra.mrb[0].mxu0 %v298
    %v417 = vpop.f32.mrb[0].mxu0
    %v418 = vadd.f32 %v257, %v417
    %v419 = vpop.f32.mrb[0].mxu0
    %420 = vmatprep.mubr.f32.mxu0 0.0
    %421 = vmatmul.mubr.f32.gmra.mrb[0].mxu0 %v301
    %v422 = vpop.f32.mrb[0].mxu0
    %v423 = vadd.f32 %v262, %v422
    %v424 = vpop.f32.mrb[0].mxu0
    %425 = vmatprep.mubr.f32.mxu0 0.0
    %426 = vmatmul.mubr.f32.gmra.mrb[0].mxu0 %v304
    %v427 = vpop.f32.mrb[0].mxu0
    %v428 = vadd.f32 %v267, %v427
    %v429 = vpop.f32.mrb[0].mxu0
    %430 = vdwg.mxu0
    %431 = vxpose.xlu0.b32.start [1/16] %v373, 128
    %432 = vxpose.xlu0.b32.cont [2/16] 0.0, 128
    %433 = vxpose.xlu0.b32.cont [3/16] 0.0, 128
    %434 = vxpose.xlu0.b32.cont [4/16] 0.0, 128
    %435 = vxpose.xlu0.b32.cont [5/16] 0.0, 128
    %436 = vxpose.xlu0.b32.cont [6/16] 0.0, 128
    %437 = vxpose.xlu0.b32.cont [7/16] 0.0, 128
    %438 = vxpose.xlu0.b32.cont [8/16] 0.0, 128
    %439 = vxpose.xlu0.b32.cont [9/16] 0.0, 128
    %440 = vxpose.xlu0.b32.cont [10/16] 0.0, 128
    %441 = vxpose.xlu0.b32.cont [11/16] 0.0, 128
    %442 = vxpose.xlu0.b32.cont [12/16] 0.0, 128
    %443 = vxpose.xlu0.b32.cont [13/16] 0.0, 128
    %444 = vxpose.xlu0.b32.cont [14/16] 0.0, 128
    %445 = vxpose.xlu0.b32.cont [15/16] 0.0, 128
    %446 = vxpose.xlu0.b32.end [16/16] 0.0, 128
    %v447 = vpop.trf.xlu0
    %v448 = vpop.trf.xlu0
    %v449 = vpop.trf.xlu0
    %v450 = vpop.trf.xlu0
    %v451 = vpop.trf.xlu0
    %v452 = vpop.trf.xlu0
    %v453 = vpop.trf.xlu0
    %v454 = vpop.trf.xlu0
    %v455 = vpop.trf.xlu0
    %v456 = vpop.trf.xlu0
    %v457 = vpop.trf.xlu0
    %v458 = vpop.trf.xlu0
    %v459 = vpop.trf.xlu0
    %v460 = vpop.trf.xlu0
    %v461 = vpop.trf.xlu0
    %v462 = vpop.trf.xlu0
    %463 = vxpose.xlu0.b32.start [1/16] %v388, 128
    %464 = vxpose.xlu0.b32.cont [2/16] 0.0, 128
    %465 = vxpose.xlu0.b32.cont [3/16] 0.0, 128
    %466 = vxpose.xlu0.b32.cont [4/16] 0.0, 128
    %467 = vxpose.xlu0.b32.cont [5/16] 0.0, 128
    %468 = vxpose.xlu0.b32.cont [6/16] 0.0, 128
    %469 = vxpose.xlu0.b32.cont [7/16] 0.0, 128
    %470 = vxpose.xlu0.b32.cont [8/16] 0.0, 128
    %471 = vxpose.xlu0.b32.cont [9/16] 0.0, 128
    %472 = vxpose.xlu0.b32.cont [10/16] 0.0, 128
    %473 = vxpose.xlu0.b32.cont [11/16] 0.0, 128
    %474 = vxpose.xlu0.b32.cont [12/16] 0.0, 128
    %475 = vxpose.xlu0.b32.cont [13/16] 0.0, 128
    %476 = vxpose.xlu0.b32.cont [14/16] 0.0, 128
    %477 = vxpose.xlu0.b32.cont [15/16] 0.0, 128
    %478 = vxpose.xlu0.b32.end [16/16] 0.0, 128
    %v479 = vpop.trf.xlu0
    %v480 = vpop.trf.xlu0
    %v481 = vpop.trf.xlu0
    %v482 = vpop.trf.xlu0
    %v483 = vpop.trf.xlu0
    %v484 = vpop.trf.xlu0
    %v485 = vpop.trf.xlu0
    %v486 = vpop.trf.xlu0
    %v487 = vpop.trf.xlu0
    %v488 = vpop.trf.xlu0
    %v489 = vpop.trf.xlu0
    %v490 = vpop.trf.xlu0
    %v491 = vpop.trf.xlu0
    %v492 = vpop.trf.xlu0
    %v493 = vpop.trf.xlu0
    %v494 = vpop.trf.xlu0
    %495 = vxpose.xlu0.b32.start [1/16] %v403, 128
    %496 = vxpose.xlu0.b32.cont [2/16] 0.0, 128
    %497 = vxpose.xlu0.b32.cont [3/16] 0.0, 128
    %498 = vxpose.xlu0.b32.cont [4/16] 0.0, 128
    %499 = vxpose.xlu0.b32.cont [5/16] 0.0, 128
    %500 = vxpose.xlu0.b32.cont [6/16] 0.0, 128
    %501 = vxpose.xlu0.b32.cont [7/16] 0.0, 128
    %502 = vxpose.xlu0.b32.cont [8/16] 0.0, 128
    %503 = vxpose.xlu0.b32.cont [9/16] 0.0, 128
    %504 = vxpose.xlu0.b32.cont [10/16] 0.0, 128
    %505 = vxpose.xlu0.b32.cont [11/16] 0.0, 128
    %506 = vxpose.xlu0.b32.cont [12/16] 0.0, 128
    %507 = vxpose.xlu0.b32.cont [13/16] 0.0, 128
    %508 = vxpose.xlu0.b32.cont [14/16] 0.0, 128
    %509 = vxpose.xlu0.b32.cont [15/16] 0.0, 128
    %510 = vxpose.xlu0.b32.end [16/16] 0.0, 128
    %v511 = vpop.trf.xlu0
    %v512 = vpop.trf.xlu0
    %v513 = vpop.trf.xlu0
    %v514 = vpop.trf.xlu0
    %v515 = vpop.trf.xlu0
    %v516 = vpop.trf.xlu0
    %v517 = vpop.trf.xlu0
    %v518 = vpop.trf.xlu0
    %v519 = vpop.trf.xlu0
    %v520 = vpop.trf.xlu0
    %v521 = vpop.trf.xlu0
    %v522 = vpop.trf.xlu0
    %v523 = vpop.trf.xlu0
    %v524 = vpop.trf.xlu0
    %v525 = vpop.trf.xlu0
    %v526 = vpop.trf.xlu0
    %527 = vxpose.xlu0.b32.start [1/16] %v418, 128
    %528 = vxpose.xlu0.b32.cont [2/16] 0.0, 128
    %529 = vxpose.xlu0.b32.cont [3/16] 0.0, 128
    %530 = vxpose.xlu0.b32.cont [4/16] 0.0, 128
    %531 = vxpose.xlu0.b32.cont [5/16] 0.0, 128
    %532 = vxpose.xlu0.b32.cont [6/16] 0.0, 128
    %533 = vxpose.xlu0.b32.cont [7/16] 0.0, 128
    %534 = vxpose.xlu0.b32.cont [8/16] 0.0, 128
    %535 = vxpose.xlu0.b32.cont [9/16] 0.0, 128
    %536 = vxpose.xlu0.b32.cont [10/16] 0.0, 128
    %537 = vxpose.xlu0.b32.cont [11/16] 0.0, 128
    %538 = vxpose.xlu0.b32.cont [12/16] 0.0, 128
    %539 = vxpose.xlu0.b32.cont [13/16] 0.0, 128
    %540 = vxpose.xlu0.b32.cont [14/16] 0.0, 128
    %541 = vxpose.xlu0.b32.cont [15/16] 0.0, 128
    %542 = vxpose.xlu0.b32.end [16/16] 0.0, 128
    %v543 = vpop.trf.xlu0
    %v544 = vpop.trf.xlu0
    %v545 = vpop.trf.xlu0
    %v546 = vpop.trf.xlu0
    %v547 = vpop.trf.xlu0
    %v548 = vpop.trf.xlu0
    %v549 = vpop.trf.xlu0
    %v550 = vpop.trf.xlu0
    %v551 = vpop.trf.xlu0
    %v552 = vpop.trf.xlu0
    %v553 = vpop.trf.xlu0
    %v554 = vpop.trf.xlu0
    %v555 = vpop.trf.xlu0
    %v556 = vpop.trf.xlu0
    %v557 = vpop.trf.xlu0
    %v558 = vpop.trf.xlu0
    %vm559 = vcmask 64512
    %v561 = vsel %vm559, %v447, 0
    %v564 = vsel %vm559, %v448, 0
    %v567 = vsel %vm559, %v449, 0
    %v570 = vsel %vm559, %v450, 0
    %v573 = vsel %vm559, %v451, 0
    %v576 = vsel %vm559, %v452, 0
    %v579 = vsel %vm559, %v453, 0
    %v582 = vsel %vm559, %v454, 0
    %v585 = vsel %vm559, %v455, 0
    %v588 = vsel %vm559, %v456, 0
    %v591 = vsel %vm559, %v457, 0
    %v594 = vsel %vm559, %v458, 0
    %v597 = vsel %vm559, %v459, 0
    %v600 = vsel %vm559, %v460, 0
    %v603 = vsel %vm559, %v461, 0
    %v606 = vsel %vm559, %v462, 0
    %608 = vmatprep.subr.mxu0 0.0
    %609 = vmatpush1.msra.mxu0 %v378
    %610 = vmatprep.subr.mxu0 0.0
    %611 = vmatpush1.msra.mxu0 0.0
    %612 = vmatprep.subr.mxu0 0.0
    %613 = vmatpush1.msra.mxu0 0.0
    %614 = vmatprep.subr.mxu0 0.0
    %615 = vmatpush1.msra.mxu0 0.0
    %616 = vmatprep.subr.mxu0 0.0
    %617 = vmatpush1.msra.mxu0 0.0
    %618 = vmatprep.subr.mxu0 0.0
    %619 = vmatpush1.msra.mxu0 0.0
    %620 = vmatprep.subr.mxu0 0.0
    %621 = vmatpush1.msra.mxu0 0.0
    %622 = vmatprep.subr.mxu0 0.0
    %623 = vmatpush1.msra.mxu0 0.0
    %624 = vmatprep.subr.mxu0 0.0
    %625 = vmatpush1.msra.mxu0 0.0
    %626 = vmatprep.subr.mxu0 0.0
    %627 = vmatpush1.msra.mxu0 0.0
    %628 = vmatprep.subr.mxu0 0.0
    %629 = vmatpush1.msra.mxu0 0.0
    %630 = vmatprep.subr.mxu0 0.0
    %631 = vmatpush1.msra.mxu0 0.0
    %632 = vmatprep.subr.mxu0 0.0
    %633 = vmatpush1.msra.mxu0 0.0
    %634 = vmatprep.subr.mxu0 0.0
    %635 = vmatpush1.msra.mxu0 0.0
    %636 = vmatprep.subr.mxu0 0.0
    %637 = vmatpush1.msra.mxu0 0.0
    %638 = vmatprep.subr.mxu0 0.0
    %639 = vmatpush1.msra.mxu0 0.0
    %640 = vmatprep.subr.mxu0 0.0
    %641 = vmatpush1.msra.mxu0 0.0
    %642 = vmatprep.subr.mxu0 0.0
    %643 = vmatpush1.msra.mxu0 0.0
    %644 = vmatprep.subr.mxu0 0.0
    %645 = vmatpush1.msra.mxu0 0.0
    %646 = vmatprep.subr.mxu0 0.0
    %647 = vmatpush1.msra.mxu0 0.0
    %648 = vmatprep.subr.mxu0 0.0
    %649 = vmatpush1.msra.mxu0 0.0
    %650 = vmatprep.subr.mxu0 0.0
    %651 = vmatpush1.msra.mxu0 0.0
    %652 = vmatprep.subr.mxu0 0.0
    %653 = vmatpush1.msra.mxu0 0.0
    %654 = vmatprep.subr.mxu0 0.0
    %655 = vmatpush1.msra.mxu0 0.0
    %656 = vmatprep.subr.mxu0 0.0
    %657 = vmatpush1.msra.mxu0 0.0
    %658 = vmatprep.subr.mxu0 0.0
    %659 = vmatpush1.msra.mxu0 0.0
    %660 = vmatprep.subr.mxu0 0.0
    %661 = vmatpush1.msra.mxu0 0.0
    %662 = vmatprep.subr.mxu0 0.0
    %663 = vmatpush1.msra.mxu0 0.0
    %664 = vmatprep.subr.mxu0 0.0
    %665 = vmatpush1.msra.mxu0 0.0
    %666 = vmatprep.subr.mxu0 0.0
    %667 = vmatpush1.msra.mxu0 0.0
    %668 = vmatprep.subr.mxu0 0.0
    %669 = vmatpush1.msra.mxu0 0.0
    %670 = vmatprep.subr.mxu0 0.0
    %671 = vmatpush1.msra.mxu0 0.0
    %672 = vmatprep.mubr.f32.mxu0 0.0
    %673 = vmatmul.mubr.f32.gmra.mrb[0].mxu0 %v561
    %v674 = vpop.f32.mrb[0].mxu0
    %v675 = vadd.f32 0.0, %v674
    %v676 = vpop.f32.mrb[0].mxu0
    %677 = vmatprep.mubr.f32.mxu0 0.0
    %678 = vmatmul.mubr.f32.gmra.mrb[0].mxu0 %v564
    %v679 = vpop.f32.mrb[0].mxu0
    %v680 = vadd.f32 0.0, %v679
    %v681 = vpop.f32.mrb[0].mxu0
    %682 = vmatprep.mubr.f32.mxu0 0.0
    %683 = vmatmul.mubr.f32.gmra.mrb[0].mxu0 %v567
    %v684 = vpop.f32.mrb[0].mxu0
    %v685 = vadd.f32 0.0, %v684
    %v686 = vpop.f32.mrb[0].mxu0
    %687 = vmatprep.mubr.f32.mxu0 0.0
    %688 = vmatmul.mubr.f32.gmra.mrb[0].mxu0 %v570
    %v689 = vpop.f32.mrb[0].mxu0
    %v690 = vadd.f32 0.0, %v689
    %v691 = vpop.f32.mrb[0].mxu0
    %692 = vmatprep.mubr.f32.mxu0 0.0
    %693 = vmatmul.mubr.f32.gmra.mrb[0].mxu0 %v573
    %v694 = vpop.f32.mrb[0].mxu0
    %v695 = vadd.f32 0.0, %v694
    %v696 = vpop.f32.mrb[0].mxu0
    %697 = vmatprep.mubr.f32.mxu0 0.0
    %698 = vmatmul.mubr.f32.gmra.mrb[0].mxu0 %v576
    %v699 = vpop.f32.mrb[0].mxu0
    %v700 = vadd.f32 0.0, %v699
    %v701 = vpop.f32.mrb[0].mxu0
    %702 = vmatprep.mubr.f32.mxu0 0.0
    %703 = vmatmul.mubr.f32.gmra.mrb[0].mxu0 %v579
    %v704 = vpop.f32.mrb[0].mxu0
    %v705 = vadd.f32 0.0, %v704
    %v706 = vpop.f32.mrb[0].mxu0
    %707 = vmatprep.mubr.f32.mxu0 0.0
    %708 = vmatmul.mubr.f32.gmra.mrb[0].mxu0 %v582
    %v709 = vpop.f32.mrb[0].mxu0
    %v710 = vadd.f32 0.0, %v709
    %v711 = vpop.f32.mrb[0].mxu0
    %712 = vmatprep.mubr.f32.mxu0 0.0
    %713 = vmatmul.mubr.f32.gmra.mrb[0].mxu0 %v585
    %v714 = vpop.f32.mrb[0].mxu0
    %v715 = vadd.f32 0.0, %v714
    %v716 = vpop.f32.mrb[0].mxu0
    %717 = vmatprep.mubr.f32.mxu0 0.0
    %718 = vmatmul.mubr.f32.gmra.mrb[0].mxu0 %v588
    %v719 = vpop.f32.mrb[0].mxu0
    %v720 = vadd.f32 0.0, %v719
    %v721 = vpop.f32.mrb[0].mxu0
    %722 = vmatprep.mubr.f32.mxu0 0.0
    %723 = vmatmul.mubr.f32.gmra.mrb[0].mxu0 %v591
    %v724 = vpop.f32.mrb[0].mxu0
    %v725 = vadd.f32 0.0, %v724
    %v726 = vpop.f32.mrb[0].mxu0
    %727 = vmatprep.mubr.f32.mxu0 0.0
    %728 = vmatmul.mubr.f32.gmra.mrb[0].mxu0 %v594
    %v729 = vpop.f32.mrb[0].mxu0
    %v730 = vadd.f32 0.0, %v729
    %v731 = vpop.f32.mrb[0].mxu0
    %732 = vmatprep.mubr.f32.mxu0 0.0
    %733 = vmatmul.mubr.f32.gmra.mrb[0].mxu0 %v597
    %v734 = vpop.f32.mrb[0].mxu0
    %v735 = vadd.f32 0.0, %v734
    %v736 = vpop.f32.mrb[0].mxu0
    %737 = vmatprep.mubr.f32.mxu0 0.0
    %738 = vmatmul.mubr.f32.gmra.mrb[0].mxu0 %v600
    %v739 = vpop.f32.mrb[0].mxu0
    %v740 = vadd.f32 0.0, %v739
    %v741 = vpop.f32.mrb[0].mxu0
    %742 = vmatprep.mubr.f32.mxu0 0.0
    %743 = vmatmul.mubr.f32.gmra.mrb[0].mxu0 %v603
    %v744 = vpop.f32.mrb[0].mxu0
    %v745 = vadd.f32 0.0, %v744
    %v746 = vpop.f32.mrb[0].mxu0
    %747 = vmatprep.mubr.f32.mxu0 0.0
    %748 = vmatmul.mubr.f32.gmra.mrb[0].mxu0 %v606
    %v749 = vpop.f32.mrb[0].mxu0
    %v750 = vadd.f32 0.0, %v749
    %v751 = vpop.f32.mrb[0].mxu0
    %752 = vdwg.mxu0
    %v754 = vsel %vm559, %v479, 0
    %v757 = vsel %vm559, %v480, 0
    %v760 = vsel %vm559, %v481, 0
    %v763 = vsel %vm559, %v482, 0
    %v766 = vsel %vm559, %v483, 0
    %v769 = vsel %vm559, %v484, 0
    %v772 = vsel %vm559, %v485, 0
    %v775 = vsel %vm559, %v486, 0
    %v778 = vsel %vm559, %v487, 0
    %v781 = vsel %vm559, %v488, 0
    %v784 = vsel %vm559, %v489, 0
    %v787 = vsel %vm559, %v490, 0
    %v790 = vsel %vm559, %v491, 0
    %v793 = vsel %vm559, %v492, 0
    %v796 = vsel %vm559, %v493, 0
    %v799 = vsel %vm559, %v494, 0
    %801 = vmatprep.subr.mxu0 0.0
    %802 = vmatpush1.msra.mxu0 %v393
    %803 = vmatprep.subr.mxu0 0.0
    %804 = vmatpush1.msra.mxu0 0.0
    %805 = vmatprep.subr.mxu0 0.0
    %806 = vmatpush1.msra.mxu0 0.0
    %807 = vmatprep.subr.mxu0 0.0
    %808 = vmatpush1.msra.mxu0 0.0
    %809 = vmatprep.subr.mxu0 0.0
    %810 = vmatpush1.msra.mxu0 0.0
    %811 = vmatprep.subr.mxu0 0.0
    %812 = vmatpush1.msra.mxu0 0.0
    %813 = vmatprep.subr.mxu0 0.0
    %814 = vmatpush1.msra.mxu0 0.0
    %815 = vmatprep.subr.mxu0 0.0
    %816 = vmatpush1.msra.mxu0 0.0
    %817 = vmatprep.subr.mxu0 0.0
    %818 = vmatpush1.msra.mxu0 0.0
    %819 = vmatprep.subr.mxu0 0.0
    %820 = vmatpush1.msra.mxu0 0.0
    %821 = vmatprep.subr.mxu0 0.0
    %822 = vmatpush1.msra.mxu0 0.0
    %823 = vmatprep.subr.mxu0 0.0
    %824 = vmatpush1.msra.mxu0 0.0
    %825 = vmatprep.subr.mxu0 0.0
    %826 = vmatpush1.msra.mxu0 0.0
    %827 = vmatprep.subr.mxu0 0.0
    %828 = vmatpush1.msra.mxu0 0.0
    %829 = vmatprep.subr.mxu0 0.0
    %830 = vmatpush1.msra.mxu0 0.0
    %831 = vmatprep.subr.mxu0 0.0
    %832 = vmatpush1.msra.mxu0 0.0
    %833 = vmatprep.subr.mxu0 0.0
    %834 = vmatpush1.msra.mxu0 0.0
    %835 = vmatprep.subr.mxu0 0.0
    %836 = vmatpush1.msra.mxu0 0.0
    %837 = vmatprep.subr.mxu0 0.0
    %838 = vmatpush1.msra.mxu0 0.0
    %839 = vmatprep.subr.mxu0 0.0
    %840 = vmatpush1.msra.mxu0 0.0
    %841 = vmatprep.subr.mxu0 0.0
    %842 = vmatpush1.msra.mxu0 0.0
    %843 = vmatprep.subr.mxu0 0.0
    %844 = vmatpush1.msra.mxu0 0.0
    %845 = vmatprep.subr.mxu0 0.0
    %846 = vmatpush1.msra.mxu0 0.0
    %847 = vmatprep.subr.mxu0 0.0
    %848 = vmatpush1.msra.mxu0 0.0
    %849 = vmatprep.subr.mxu0 0.0
    %850 = vmatpush1.msra.mxu0 0.0
    %851 = vmatprep.subr.mxu0 0.0
    %852 = vmatpush1.msra.mxu0 0.0
    %853 = vmatprep.subr.mxu0 0.0
    %854 = vmatpush1.msra.mxu0 0.0
    %855 = vmatprep.subr.mxu0 0.0
    %856 = vmatpush1.msra.mxu0 0.0
    %857 = vmatprep.subr.mxu0 0.0
    %858 = vmatpush1.msra.mxu0 0.0
    %859 = vmatprep.subr.mxu0 0.0
    %860 = vmatpush1.msra.mxu0 0.0
    %861 = vmatprep.subr.mxu0 0.0
    %862 = vmatpush1.msra.mxu0 0.0
    %863 = vmatprep.subr.mxu0 0.0
    %864 = vmatpush1.msra.mxu0 0.0
    %865 = vmatprep.mubr.f32.mxu0 0.0
    %866 = vmatmul.mubr.f32.gmra.mrb[0].mxu0 %v754
    %v867 = vpop.f32.mrb[0].mxu0
    %v868 = vadd.f32 0.0, %v867
    %v869 = vpop.f32.mrb[0].mxu0
    %870 = vmatprep.mubr.f32.mxu0 0.0
    %871 = vmatmul.mubr.f32.gmra.mrb[0].mxu0 %v757
    %v872 = vpop.f32.mrb[0].mxu0
    %v873 = vadd.f32 0.0, %v872
    %v874 = vpop.f32.mrb[0].mxu0
    %875 = vmatprep.mubr.f32.mxu0 0.0
    %876 = vmatmul.mubr.f32.gmra.mrb[0].mxu0 %v760
    %v877 = vpop.f32.mrb[0].mxu0
    %v878 = vadd.f32 0.0, %v877
    %v879 = vpop.f32.mrb[0].mxu0
    %880 = vmatprep.mubr.f32.mxu0 0.0
    %881 = vmatmul.mubr.f32.gmra.mrb[0].mxu0 %v763
    %v882 = vpop.f32.mrb[0].mxu0
    %v883 = vadd.f32 0.0, %v882
    %v884 = vpop.f32.mrb[0].mxu0
    %885 = vmatprep.mubr.f32.mxu0 0.0
    %886 = vmatmul.mubr.f32.gmra.mrb[0].mxu0 %v766
    %v887 = vpop.f32.mrb[0].mxu0
    %v888 = vadd.f32 0.0, %v887
    %v889 = vpop.f32.mrb[0].mxu0
    %890 = vmatprep.mubr.f32.mxu0 0.0
    %891 = vmatmul.mubr.f32.gmra.mrb[0].mxu0 %v769
    %v892 = vpop.f32.mrb[0].mxu0
    %v893 = vadd.f32 0.0, %v892
    %v894 = vpop.f32.mrb[0].mxu0
    %895 = vmatprep.mubr.f32.mxu0 0.0
    %896 = vmatmul.mubr.f32.gmra.mrb[0].mxu0 %v772
    %v897 = vpop.f32.mrb[0].mxu0
    %v898 = vadd.f32 0.0, %v897
    %v899 = vpop.f32.mrb[0].mxu0
    %900 = vmatprep.mubr.f32.mxu0 0.0
    %901 = vmatmul.mubr.f32.gmra.mrb[0].mxu0 %v775
    %v902 = vpop.f32.mrb[0].mxu0
    %v903 = vadd.f32 0.0, %v902
    %v904 = vpop.f32.mrb[0].mxu0
    %905 = vmatprep.mubr.f32.mxu0 0.0
    %906 = vmatmul.mubr.f32.gmra.mrb[0].mxu0 %v778
    %v907 = vpop.f32.mrb[0].mxu0
    %v908 = vadd.f32 0.0, %v907
    %v909 = vpop.f32.mrb[0].mxu0
    %910 = vmatprep.mubr.f32.mxu0 0.0
    %911 = vmatmul.mubr.f32.gmra.mrb[0].mxu0 %v781
    %v912 = vpop.f32.mrb[0].mxu0
    %v913 = vadd.f32 0.0, %v912
    %v914 = vpop.f32.mrb[0].mxu0
    %915 = vmatprep.mubr.f32.mxu0 0.0
    %916 = vmatmul.mubr.f32.gmra.mrb[0].mxu0 %v784
    %v917 = vpop.f32.mrb[0].mxu0
    %v918 = vadd.f32 0.0, %v917
    %v919 = vpop.f32.mrb[0].mxu0
    %920 = vmatprep.mubr.f32.mxu0 0.0
    %921 = vmatmul.mubr.f32.gmra.mrb[0].mxu0 %v787
    %v922 = vpop.f32.mrb[0].mxu0
    %v923 = vadd.f32 0.0, %v922
    %v924 = vpop.f32.mrb[0].mxu0
    %925 = vmatprep.mubr.f32.mxu0 0.0
    %926 = vmatmul.mubr.f32.gmra.mrb[0].mxu0 %v790
    %v927 = vpop.f32.mrb[0].mxu0
    %v928 = vadd.f32 0.0, %v927
    %v929 = vpop.f32.mrb[0].mxu0
    %930 = vmatprep.mubr.f32.mxu0 0.0
    %931 = vmatmul.mubr.f32.gmra.mrb[0].mxu0 %v793
    %v932 = vpop.f32.mrb[0].mxu0
    %v933 = vadd.f32 0.0, %v932
    %v934 = vpop.f32.mrb[0].mxu0
    %935 = vmatprep.mubr.f32.mxu0 0.0
    %936 = vmatmul.mubr.f32.gmra.mrb[0].mxu0 %v796
    %v937 = vpop.f32.mrb[0].mxu0
    %v938 = vadd.f32 0.0, %v937
    %v939 = vpop.f32.mrb[0].mxu0
    %940 = vmatprep.mubr.f32.mxu0 0.0
    %941 = vmatmul.mubr.f32.gmra.mrb[0].mxu0 %v799
    %v942 = vpop.f32.mrb[0].mxu0
    %v943 = vadd.f32 0.0, %v942
    %v944 = vpop.f32.mrb[0].mxu0
    %945 = vdwg.mxu0
    %v947 = vsel %vm559, %v511, 0
    %v950 = vsel %vm559, %v512, 0
    %v953 = vsel %vm559, %v513, 0
    %v956 = vsel %vm559, %v514, 0
    %v959 = vsel %vm559, %v515, 0
    %v962 = vsel %vm559, %v516, 0
    %v965 = vsel %vm559, %v517, 0
    %v968 = vsel %vm559, %v518, 0
    %v971 = vsel %vm559, %v519, 0
    %v974 = vsel %vm559, %v520, 0
    %v977 = vsel %vm559, %v521, 0
    %v980 = vsel %vm559, %v522, 0
    %v983 = vsel %vm559, %v523, 0
    %v986 = vsel %vm559, %v524, 0
    %v989 = vsel %vm559, %v525, 0
    %v992 = vsel %vm559, %v526, 0
    %994 = vmatprep.subr.mxu0 0.0
    %995 = vmatpush1.msra.mxu0 %v408
    %996 = vmatprep.subr.mxu0 0.0
    %997 = vmatpush1.msra.mxu0 0.0
    %998 = vmatprep.subr.mxu0 0.0
    %999 = vmatpush1.msra.mxu0 0.0
    %1000 = vmatprep.subr.mxu0 0.0
    %1001 = vmatpush1.msra.mxu0 0.0
    %1002 = vmatprep.subr.mxu0 0.0
    %1003 = vmatpush1.msra.mxu0 0.0
    %1004 = vmatprep.subr.mxu0 0.0
    %1005 = vmatpush1.msra.mxu0 0.0
    %1006 = vmatprep.subr.mxu0 0.0
    %1007 = vmatpush1.msra.mxu0 0.0
    %1008 = vmatprep.subr.mxu0 0.0
    %1009 = vmatpush1.msra.mxu0 0.0
    %1010 = vmatprep.subr.mxu0 0.0
    %1011 = vmatpush1.msra.mxu0 0.0
    %1012 = vmatprep.subr.mxu0 0.0
    %1013 = vmatpush1.msra.mxu0 0.0
    %1014 = vmatprep.subr.mxu0 0.0
    %1015 = vmatpush1.msra.mxu0 0.0
    %1016 = vmatprep.subr.mxu0 0.0
    %1017 = vmatpush1.msra.mxu0 0.0
    %1018 = vmatprep.subr.mxu0 0.0
    %1019 = vmatpush1.msra.mxu0 0.0
    %1020 = vmatprep.subr.mxu0 0.0
    %1021 = vmatpush1.msra.mxu0 0.0
    %1022 = vmatprep.subr.mxu0 0.0
    %1023 = vmatpush1.msra.mxu0 0.0
    %1024 = vmatprep.subr.mxu0 0.0
    %1025 = vmatpush1.msra.mxu0 0.0
    %1026 = vmatprep.subr.mxu0 0.0
    %1027 = vmatpush1.msra.mxu0 0.0
    %1028 = vmatprep.subr.mxu0 0.0
    %1029 = vmatpush1.msra.mxu0 0.0
    %1030 = vmatprep.subr.mxu0 0.0
    %1031 = vmatpush1.msra.mxu0 0.0
    %1032 = vmatprep.subr.mxu0 0.0
    %1033 = vmatpush1.msra.mxu0 0.0
    %1034 = vmatprep.subr.mxu0 0.0
    %1035 = vmatpush1.msra.mxu0 0.0
    %1036 = vmatprep.subr.mxu0 0.0
    %1037 = vmatpush1.msra.mxu0 0.0
    %1038 = vmatprep.subr.mxu0 0.0
    %1039 = vmatpush1.msra.mxu0 0.0
    %1040 = vmatprep.subr.mxu0 0.0
    %1041 = vmatpush1.msra.mxu0 0.0
    %1042 = vmatprep.subr.mxu0 0.0
    %1043 = vmatpush1.msra.mxu0 0.0
    %1044 = vmatprep.subr.mxu0 0.0
    %1045 = vmatpush1.msra.mxu0 0.0
    %1046 = vmatprep.subr.mxu0 0.0
    %1047 = vmatpush1.msra.mxu0 0.0
    %1048 = vmatprep.subr.mxu0 0.0
    %1049 = vmatpush1.msra.mxu0 0.0
    %1050 = vmatprep.subr.mxu0 0.0
    %1051 = vmatpush1.msra.mxu0 0.0
    %1052 = vmatprep.subr.mxu0 0.0
    %1053 = vmatpush1.msra.mxu0 0.0
    %1054 = vmatprep.subr.mxu0 0.0
    %1055 = vmatpush1.msra.mxu0 0.0
    %1056 = vmatprep.subr.mxu0 0.0
    %1057 = vmatpush1.msra.mxu0 0.0
    %1058 = vmatprep.mubr.f32.mxu0 0.0
    %1059 = vmatmul.mubr.f32.gmra.mrb[0].mxu0 %v947
    %v1060 = vpop.f32.mrb[0].mxu0
    %v1061 = vadd.f32 0.0, %v1060
    %v1062 = vpop.f32.mrb[0].mxu0
    %1063 = vmatprep.mubr.f32.mxu0 0.0
    %1064 = vmatmul.mubr.f32.gmra.mrb[0].mxu0 %v950
    %v1065 = vpop.f32.mrb[0].mxu0
    %v1066 = vadd.f32 0.0, %v1065
    %v1067 = vpop.f32.mrb[0].mxu0
    %1068 = vmatprep.mubr.f32.mxu0 0.0
    %1069 = vmatmul.mubr.f32.gmra.mrb[0].mxu0 %v953
    %v1070 = vpop.f32.mrb[0].mxu0
    %v1071 = vadd.f32 0.0, %v1070
    %v1072 = vpop.f32.mrb[0].mxu0
    %1073 = vmatprep.mubr.f32.mxu0 0.0
    %1074 = vmatmul.mubr.f32.gmra.mrb[0].mxu0 %v956
    %v1075 = vpop.f32.mrb[0].mxu0
    %v1076 = vadd.f32 0.0, %v1075
    %v1077 = vpop.f32.mrb[0].mxu0
    %1078 = vmatprep.mubr.f32.mxu0 0.0
    %1079 = vmatmul.mubr.f32.gmra.mrb[0].mxu0 %v959
    %v1080 = vpop.f32.mrb[0].mxu0
    %v1081 = vadd.f32 0.0, %v1080
    %v1082 = vpop.f32.mrb[0].mxu0
    %1083 = vmatprep.mubr.f32.mxu0 0.0
    %1084 = vmatmul.mubr.f32.gmra.mrb[0].mxu0 %v962
    %v1085 = vpop.f32.mrb[0].mxu0
    %v1086 = vadd.f32 0.0, %v1085
    %v1087 = vpop.f32.mrb[0].mxu0
    %1088 = vmatprep.mubr.f32.mxu0 0.0
    %1089 = vmatmul.mubr.f32.gmra.mrb[0].mxu0 %v965
    %v1090 = vpop.f32.mrb[0].mxu0
    %v1091 = vadd.f32 0.0, %v1090
    %v1092 = vpop.f32.mrb[0].mxu0
    %1093 = vmatprep.mubr.f32.mxu0 0.0
    %1094 = vmatmul.mubr.f32.gmra.mrb[0].mxu0 %v968
    %v1095 = vpop.f32.mrb[0].mxu0
    %v1096 = vadd.f32 0.0, %v1095
    %v1097 = vpop.f32.mrb[0].mxu0
    %1098 = vmatprep.mubr.f32.mxu0 0.0
    %1099 = vmatmul.mubr.f32.gmra.mrb[0].mxu0 %v971
    %v1100 = vpop.f32.mrb[0].mxu0
    %v1101 = vadd.f32 0.0, %v1100
    %v1102 = vpop.f32.mrb[0].mxu0
    %1103 = vmatprep.mubr.f32.mxu0 0.0
    %1104 = vmatmul.mubr.f32.gmra.mrb[0].mxu0 %v974
    %v1105 = vpop.f32.mrb[0].mxu0
    %v1106 = vadd.f32 0.0, %v1105
    %v1107 = vpop.f32.mrb[0].mxu0
    %1108 = vmatprep.mubr.f32.mxu0 0.0
    %1109 = vmatmul.mubr.f32.gmra.mrb[0].mxu0 %v977
    %v1110 = vpop.f32.mrb[0].mxu0
    %v1111 = vadd.f32 0.0, %v1110
    %v1112 = vpop.f32.mrb[0].mxu0
    %1113 = vmatprep.mubr.f32.mxu0 0.0
    %1114 = vmatmul.mubr.f32.gmra.mrb[0].mxu0 %v980
    %v1115 = vpop.f32.mrb[0].mxu0
    %v1116 = vadd.f32 0.0, %v1115
    %v1117 = vpop.f32.mrb[0].mxu0
    %1118 = vmatprep.mubr.f32.mxu0 0.0
    %1119 = vmatmul.mubr.f32.gmra.mrb[0].mxu0 %v983
    %v1120 = vpop.f32.mrb[0].mxu0
    %v1121 = vadd.f32 0.0, %v1120
    %v1122 = vpop.f32.mrb[0].mxu0
    %1123 = vmatprep.mubr.f32.mxu0 0.0
    %1124 = vmatmul.mubr.f32.gmra.mrb[0].mxu0 %v986
    %v1125 = vpop.f32.mrb[0].mxu0
    %v1126 = vadd.f32 0.0, %v1125
    %v1127 = vpop.f32.mrb[0].mxu0
    %1128 = vmatprep.mubr.f32.mxu0 0.0
    %1129 = vmatmul.mubr.f32.gmra.mrb[0].mxu0 %v989
    %v1130 = vpop.f32.mrb[0].mxu0
    %v1131 = vadd.f32 0.0, %v1130
    %v1132 = vpop.f32.mrb[0].mxu0
    %1133 = vmatprep.mubr.f32.mxu0 0.0
    %1134 = vmatmul.mubr.f32.gmra.mrb[0].mxu0 %v992
    %v1135 = vpop.f32.mrb[0].mxu0
    %v1136 = vadd.f32 0.0, %v1135
    %v1137 = vpop.f32.mrb[0].mxu0
    %1138 = vdwg.mxu0
    %v1140 = vsel %vm559, %v543, 0
    %v1143 = vsel %vm559, %v544, 0
    %v1146 = vsel %vm559, %v545, 0
    %v1149 = vsel %vm559, %v546, 0
    %v1152 = vsel %vm559, %v547, 0
    %v1155 = vsel %vm559, %v548, 0
    %v1158 = vsel %vm559, %v549, 0
    %v1161 = vsel %vm559, %v550, 0
    %v1164 = vsel %vm559, %v551, 0
    %v1167 = vsel %vm559, %v552, 0
    %v1170 = vsel %vm559, %v553, 0
    %v1173 = vsel %vm559, %v554, 0
    %v1176 = vsel %vm559, %v555, 0
    %v1179 = vsel %vm559, %v556, 0
    %v1182 = vsel %vm559, %v557, 0
    %v1185 = vsel %vm559, %v558, 0
    %1187 = vmatprep.subr.mxu0 0.0
    %1188 = vmatpush1.msra.mxu0 %v423
    %1189 = vmatprep.subr.mxu0 0.0
    %1190 = vmatpush1.msra.mxu0 0.0
    %1191 = vmatprep.subr.mxu0 0.0
    %1192 = vmatpush1.msra.mxu0 0.0
    %1193 = vmatprep.subr.mxu0 0.0
    %1194 = vmatpush1.msra.mxu0 0.0
    %1195 = vmatprep.subr.mxu0 0.0
    %1196 = vmatpush1.msra.mxu0 0.0
    %1197 = vmatprep.subr.mxu0 0.0
    %1198 = vmatpush1.msra.mxu0 0.0
    %1199 = vmatprep.subr.mxu0 0.0
    %1200 = vmatpush1.msra.mxu0 0.0
    %1201 = vmatprep.subr.mxu0 0.0
    %1202 = vmatpush1.msra.mxu0 0.0
    %1203 = vmatprep.subr.mxu0 0.0
    %1204 = vmatpush1.msra.mxu0 0.0
    %1205 = vmatprep.subr.mxu0 0.0
    %1206 = vmatpush1.msra.mxu0 0.0
    %1207 = vmatprep.subr.mxu0 0.0
    %1208 = vmatpush1.msra.mxu0 0.0
    %1209 = vmatprep.subr.mxu0 0.0
    %1210 = vmatpush1.msra.mxu0 0.0
    %1211 = vmatprep.subr.mxu0 0.0
    %1212 = vmatpush1.msra.mxu0 0.0
    %1213 = vmatprep.subr.mxu0 0.0
    %1214 = vmatpush1.msra.mxu0 0.0
    %1215 = vmatprep.subr.mxu0 0.0
    %1216 = vmatpush1.msra.mxu0 0.0
    %1217 = vmatprep.subr.mxu0 0.0
    %1218 = vmatpush1.msra.mxu0 0.0
    %1219 = vmatprep.subr.mxu0 0.0
    %1220 = vmatpush1.msra.mxu0 0.0
    %1221 = vmatprep.subr.mxu0 0.0
    %1222 = vmatpush1.msra.mxu0 0.0
    %1223 = vmatprep.subr.mxu0 0.0
    %1224 = vmatpush1.msra.mxu0 0.0
    %1225 = vmatprep.subr.mxu0 0.0
    %1226 = vmatpush1.msra.mxu0 0.0
    %1227 = vmatprep.subr.mxu0 0.0
    %1228 = vmatpush1.msra.mxu0 0.0
    %1229 = vmatprep.subr.mxu0 0.0
    %1230 = vmatpush1.msra.mxu0 0.0
    %1231 = vmatprep.subr.mxu0 0.0
    %1232 = vmatpush1.msra.mxu0 0.0
    %1233 = vmatprep.subr.mxu0 0.0
    %1234 = vmatpush1.msra.mxu0 0.0
    %1235 = vmatprep.subr.mxu0 0.0
    %1236 = vmatpush1.msra.mxu0 0.0
    %1237 = vmatprep.subr.mxu0 0.0
    %1238 = vmatpush1.msra.mxu0 0.0
    %1239 = vmatprep.subr.mxu0 0.0
    %1240 = vmatpush1.msra.mxu0 0.0
    %1241 = vmatprep.subr.mxu0 0.0
    %1242 = vmatpush1.msra.mxu0 0.0
    %1243 = vmatprep.subr.mxu0 0.0
    %1244 = vmatpush1.msra.mxu0 0.0
    %1245 = vmatprep.subr.mxu0 0.0
    %1246 = vmatpush1.msra.mxu0 0.0
    %1247 = vmatprep.subr.mxu0 0.0
    %1248 = vmatpush1.msra.mxu0 0.0
    %1249 = vmatprep.subr.mxu0 0.0
    %1250 = vmatpush1.msra.mxu0 0.0
    %1251 = vmatprep.mubr.f32.mxu0 0.0
    %1252 = vmatmul.mubr.f32.gmra.mrb[0].mxu0 %v1140
    %v1253 = vpop.f32.mrb[0].mxu0
    %v1254 = vadd.f32 0.0, %v1253
    %v1255 = vpop.f32.mrb[0].mxu0
    %1256 = vmatprep.mubr.f32.mxu0 0.0
    %1257 = vmatmul.mubr.f32.gmra.mrb[0].mxu0 %v1143
    %v1258 = vpop.f32.mrb[0].mxu0
    %v1259 = vadd.f32 0.0, %v1258
    %v1260 = vpop.f32.mrb[0].mxu0
    %1261 = vmatprep.mubr.f32.mxu0 0.0
    %1262 = vmatmul.mubr.f32.gmra.mrb[0].mxu0 %v1146
    %v1263 = vpop.f32.mrb[0].mxu0
    %v1264 = vadd.f32 0.0, %v1263
    %v1265 = vpop.f32.mrb[0].mxu0
    %1266 = vmatprep.mubr.f32.mxu0 0.0
    %1267 = vmatmul.mubr.f32.gmra.mrb[0].mxu0 %v1149
    %v1268 = vpop.f32.mrb[0].mxu0
    %v1269 = vadd.f32 0.0, %v1268
    %v1270 = vpop.f32.mrb[0].mxu0
    %1271 = vmatprep.mubr.f32.mxu0 0.0
    %1272 = vmatmul.mubr.f32.gmra.mrb[0].mxu0 %v1152
    %v1273 = vpop.f32.mrb[0].mxu0
    %v1274 = vadd.f32 0.0, %v1273
    %v1275 = vpop.f32.mrb[0].mxu0
    %1276 = vmatprep.mubr.f32.mxu0 0.0
    %1277 = vmatmul.mubr.f32.gmra.mrb[0].mxu0 %v1155
    %v1278 = vpop.f32.mrb[0].mxu0
    %v1279 = vadd.f32 0.0, %v1278
    %v1280 = vpop.f32.mrb[0].mxu0
    %1281 = vmatprep.mubr.f32.mxu0 0.0
    %1282 = vmatmul.mubr.f32.gmra.mrb[0].mxu0 %v1158
    %v1283 = vpop.f32.mrb[0].mxu0
    %v1284 = vadd.f32 0.0, %v1283
    %v1285 = vpop.f32.mrb[0].mxu0
    %1286 = vmatprep.mubr.f32.mxu0 0.0
    %1287 = vmatmul.mubr.f32.gmra.mrb[0].mxu0 %v1161
    %v1288 = vpop.f32.mrb[0].mxu0
    %v1289 = vadd.f32 0.0, %v1288
    %v1290 = vpop.f32.mrb[0].mxu0
    %1291 = vmatprep.mubr.f32.mxu0 0.0
    %1292 = vmatmul.mubr.f32.gmra.mrb[0].mxu0 %v1164
    %v1293 = vpop.f32.mrb[0].mxu0
    %v1294 = vadd.f32 0.0, %v1293
    %v1295 = vpop.f32.mrb[0].mxu0
    %1296 = vmatprep.mubr.f32.mxu0 0.0
    %1297 = vmatmul.mubr.f32.gmra.mrb[0].mxu0 %v1167
    %v1298 = vpop.f32.mrb[0].mxu0
    %v1299 = vadd.f32 0.0, %v1298
    %v1300 = vpop.f32.mrb[0].mxu0
    %1301 = vmatprep.mubr.f32.mxu0 0.0
    %1302 = vmatmul.mubr.f32.gmra.mrb[0].mxu0 %v1170
    %v1303 = vpop.f32.mrb[0].mxu0
    %v1304 = vadd.f32 0.0, %v1303
    %v1305 = vpop.f32.mrb[0].mxu0
    %1306 = vmatprep.mubr.f32.mxu0 0.0
    %1307 = vmatmul.mubr.f32.gmra.mrb[0].mxu0 %v1173
    %v1308 = vpop.f32.mrb[0].mxu0
    %v1309 = vadd.f32 0.0, %v1308
    %v1310 = vpop.f32.mrb[0].mxu0
    %1311 = vmatprep.mubr.f32.mxu0 0.0
    %1312 = vmatmul.mubr.f32.gmra.mrb[0].mxu0 %v1176
    %v1313 = vpop.f32.mrb[0].mxu0
    %v1314 = vadd.f32 0.0, %v1313
    %v1315 = vpop.f32.mrb[0].mxu0
    %1316 = vmatprep.mubr.f32.mxu0 0.0
    %1317 = vmatmul.mubr.f32.gmra.mrb[0].mxu0 %v1179
    %v1318 = vpop.f32.mrb[0].mxu0
    %v1319 = vadd.f32 0.0, %v1318
    %v1320 = vpop.f32.mrb[0].mxu0
    %1321 = vmatprep.mubr.f32.mxu0 0.0
    %1322 = vmatmul.mubr.f32.gmra.mrb[0].mxu0 %v1182
    %v1323 = vpop.f32.mrb[0].mxu0
    %v1324 = vadd.f32 0.0, %v1323
    %v1325 = vpop.f32.mrb[0].mxu0
    %1326 = vmatprep.mubr.f32.mxu0 0.0
    %1327 = vmatmul.mubr.f32.gmra.mrb[0].mxu0 %v1185
    %v1328 = vpop.f32.mrb[0].mxu0
    %v1329 = vadd.f32 0.0, %v1328
    %v1330 = vpop.f32.mrb[0].mxu0
    %1331 = vdwg.mxu0
    %1332 = vmax.xlane.f32.xlu0 %v675
    %v1333 = vpop.xlane.xlu0 %1332
    %1334 = vmax.xlane.f32.xlu0 %v680
    %v1335 = vpop.xlane.xlu0 %1334
    %1336 = vmax.xlane.f32.xlu0 %v685
    %v1337 = vpop.xlane.xlu0 %1336
    %1338 = vmax.xlane.f32.xlu0 %v690
    %v1339 = vpop.xlane.xlu0 %1338
    %1340 = vmax.xlane.f32.xlu0 %v695
    %v1341 = vpop.xlane.xlu0 %1340
    %1342 = vmax.xlane.f32.xlu0 %v700
    %v1343 = vpop.xlane.xlu0 %1342
    %1344 = vmax.xlane.f32.xlu0 %v705
    %v1345 = vpop.xlane.xlu0 %1344
    %1346 = vmax.xlane.f32.xlu0 %v710
    %v1347 = vpop.xlane.xlu0 %1346
    %1348 = vmax.xlane.f32.xlu0 %v715
    %v1349 = vpop.xlane.xlu0 %1348
    %1350 = vmax.xlane.f32.xlu0 %v720
    %v1351 = vpop.xlane.xlu0 %1350
    %1352 = vmax.xlane.f32.xlu0 %v725
    %v1353 = vpop.xlane.xlu0 %1352
    %1354 = vmax.xlane.f32.xlu0 %v730
    %v1355 = vpop.xlane.xlu0 %1354
    %1356 = vmax.xlane.f32.xlu0 %v735
    %v1357 = vpop.xlane.xlu0 %1356
    %1358 = vmax.xlane.f32.xlu0 %v740
    %v1359 = vpop.xlane.xlu0 %1358
    %1360 = vmax.xlane.f32.xlu0 %v745
    %v1361 = vpop.xlane.xlu0 %1360
    %1362 = vmax.xlane.f32.xlu0 %v750
    %v1363 = vpop.xlane.xlu0 %1362
    %1364 = vmax.xlane.f32.xlu0 %v868
    %v1365 = vpop.xlane.xlu0 %1364
    %1366 = vmax.xlane.f32.xlu0 %v873
    %v1367 = vpop.xlane.xlu0 %1366
    %1368 = vmax.xlane.f32.xlu0 %v878
    %v1369 = vpop.xlane.xlu0 %1368
    %1370 = vmax.xlane.f32.xlu0 %v883
    %v1371 = vpop.xlane.xlu0 %1370
    %1372 = vmax.xlane.f32.xlu0 %v888
    %v1373 = vpop.xlane.xlu0 %1372
    %1374 = vmax.xlane.f32.xlu0 %v893
    %v1375 = vpop.xlane.xlu0 %1374
    %1376 = vmax.xlane.f32.xlu0 %v898
    %v1377 = vpop.xlane.xlu0 %1376
    %1378 = vmax.xlane.f32.xlu0 %v903
    %v1379 = vpop.xlane.xlu0 %1378
    %1380 = vmax.xlane.f32.xlu0 %v908
    %v1381 = vpop.xlane.xlu0 %1380
    %1382 = vmax.xlane.f32.xlu0 %v913
    %v1383 = vpop.xlane.xlu0 %1382
    %1384 = vmax.xlane.f32.xlu0 %v918
    %v1385 = vpop.xlane.xlu0 %1384
    %1386 = vmax.xlane.f32.xlu0 %v923
    %v1387 = vpop.xlane.xlu0 %1386
    %1388 = vmax.xlane.f32.xlu0 %v928
    %v1389 = vpop.xlane.xlu0 %1388
    %1390 = vmax.xlane.f32.xlu0 %v933
    %v1391 = vpop.xlane.xlu0 %1390
    %1392 = vmax.xlane.f32.xlu0 %v938
    %v1393 = vpop.xlane.xlu0 %1392
    %1394 = vmax.xlane.f32.xlu0 %v943
    %v1395 = vpop.xlane.xlu0 %1394
    %1396 = vmax.xlane.f32.xlu0 %v1061
    %v1397 = vpop.xlane.xlu0 %1396
    %1398 = vmax.xlane.f32.xlu0 %v1066
    %v1399 = vpop.xlane.xlu0 %1398
    %1400 = vmax.xlane.f32.xlu0 %v1071
    %v1401 = vpop.xlane.xlu0 %1400
    %1402 = vmax.xlane.f32.xlu0 %v1076
    %v1403 = vpop.xlane.xlu0 %1402
    %1404 = vmax.xlane.f32.xlu0 %v1081
    %v1405 = vpop.xlane.xlu0 %1404
    %1406 = vmax.xlane.f32.xlu0 %v1086
    %v1407 = vpop.xlane.xlu0 %1406
    %1408 = vmax.xlane.f32.xlu0 %v1091
    %v1409 = vpop.xlane.xlu0 %1408
    %1410 = vmax.xlane.f32.xlu0 %v1096
    %v1411 = vpop.xlane.xlu0 %1410
    %1412 = vmax.xlane.f32.xlu0 %v1101
    %v1413 = vpop.xlane.xlu0 %1412
    %1414 = vmax.xlane.f32.xlu0 %v1106
    %v1415 = vpop.xlane.xlu0 %1414
    %1416 = vmax.xlane.f32.xlu0 %v1111
    %v1417 = vpop.xlane.xlu0 %1416
    %1418 = vmax.xlane.f32.xlu0 %v1116
    %v1419 = vpop.xlane.xlu0 %1418
    %1420 = vmax.xlane.f32.xlu0 %v1121
    %v1421 = vpop.xlane.xlu0 %1420
    %1422 = vmax.xlane.f32.xlu0 %v1126
    %v1423 = vpop.xlane.xlu0 %1422
    %1424 = vmax.xlane.f32.xlu0 %v1131
    %v1425 = vpop.xlane.xlu0 %1424
    %1426 = vmax.xlane.f32.xlu0 %v1136
    %v1427 = vpop.xlane.xlu0 %1426
    %1428 = vmax.xlane.f32.xlu0 %v1254
    %v1429 = vpop.xlane.xlu0 %1428
    %1430 = vmax.xlane.f32.xlu0 %v1259
    %v1431 = vpop.xlane.xlu0 %1430
    %1432 = vmax.xlane.f32.xlu0 %v1264
    %v1433 = vpop.xlane.xlu0 %1432
    %1434 = vmax.xlane.f32.xlu0 %v1269
    %v1435 = vpop.xlane.xlu0 %1434
    %1436 = vmax.xlane.f32.xlu0 %v1274
    %v1437 = vpop.xlane.xlu0 %1436
    %1438 = vmax.xlane.f32.xlu0 %v1279
    %v1439 = vpop.xlane.xlu0 %1438
    %1440 = vmax.xlane.f32.xlu0 %v1284
    %v1441 = vpop.xlane.xlu0 %1440
    %1442 = vmax.xlane.f32.xlu0 %v1289
    %v1443 = vpop.xlane.xlu0 %1442
    %1444 = vmax.xlane.f32.xlu0 %v1294
    %v1445 = vpop.xlane.xlu0 %1444
    %1446 = vmax.xlane.f32.xlu0 %v1299
    %v1447 = vpop.xlane.xlu0 %1446
    %1448 = vmax.xlane.f32.xlu0 %v1304
    %v1449 = vpop.xlane.xlu0 %1448
    %1450 = vmax.xlane.f32.xlu0 %v1309
    %v1451 = vpop.xlane.xlu0 %1450
    %1452 = vmax.xlane.f32.xlu0 %v1314
    %v1453 = vpop.xlane.xlu0 %1452
    %1454 = vmax.xlane.f32.xlu0 %v1319
    %v1455 = vpop.xlane.xlu0 %1454
    %1456 = vmax.xlane.f32.xlu0 %v1324
    %v1457 = vpop.xlane.xlu0 %1456
    %1458 = vmax.xlane.f32.xlu0 %v1329
    %v1459 = vpop.xlane.xlu0 %1458
    %v1460 = vsub.f32 %v675, %v1333
    %v1461 = vsub.f32 %v680, %v1335
    %v1462 = vsub.f32 %v685, %v1337
    %v1463 = vsub.f32 %v690, %v1339
    %v1464 = vsub.f32 %v695, %v1341
    %v1465 = vsub.f32 %v700, %v1343
    %v1466 = vsub.f32 %v705, %v1345
    %v1467 = vsub.f32 %v710, %v1347
    %v1468 = vsub.f32 %v715, %v1349
    %v1469 = vsub.f32 %v720, %v1351
    %v1470 = vsub.f32 %v725, %v1353
    %v1471 = vsub.f32 %v730, %v1355
    %v1472 = vsub.f32 %v735, %v1357
    %v1473 = vsub.f32 %v740, %v1359
    %v1474 = vsub.f32 %v745, %v1361
    %v1475 = vsub.f32 %v750, %v1363
    %v1476 = vsub.f32 %v868, %v1365
    %v1477 = vsub.f32 %v873, %v1367
    %v1478 = vsub.f32 %v878, %v1369
    %v1479 = vsub.f32 %v883, %v1371
    %v1480 = vsub.f32 %v888, %v1373
    %v1481 = vsub.f32 %v893, %v1375
    %v1482 = vsub.f32 %v898, %v1377
    %v1483 = vsub.f32 %v903, %v1379
    %v1484 = vsub.f32 %v908, %v1381
    %v1485 = vsub.f32 %v913, %v1383
    %v1486 = vsub.f32 %v918, %v1385
    %v1487 = vsub.f32 %v923, %v1387
    %v1488 = vsub.f32 %v928, %v1389
    %v1489 = vsub.f32 %v933, %v1391
    %v1490 = vsub.f32 %v938, %v1393
    %v1491 = vsub.f32 %v943, %v1395
    %v1492 = vsub.f32 %v1061, %v1397
    %v1493 = vsub.f32 %v1066, %v1399
    %v1494 = vsub.f32 %v1071, %v1401
    %v1495 = vsub.f32 %v1076, %v1403
    %v1496 = vsub.f32 %v1081, %v1405
    %v1497 = vsub.f32 %v1086, %v1407
    %v1498 = vsub.f32 %v1091, %v1409
    %v1499 = vsub.f32 %v1096, %v1411
    %v1500 = vsub.f32 %v1101, %v1413
    %v1501 = vsub.f32 %v1106, %v1415
    %v1502 = vsub.f32 %v1111, %v1417
    %v1503 = vsub.f32 %v1116, %v1419
    %v1504 = vsub.f32 %v1121, %v1421
    %v1505 = vsub.f32 %v1126, %v1423
    %v1506 = vsub.f32 %v1131, %v1425
    %v1507 = vsub.f32 %v1136, %v1427
    %v1508 = vsub.f32 %v1254, %v1429
    %v1509 = vsub.f32 %v1259, %v1431
    %v1510 = vsub.f32 %v1264, %v1433
    %v1511 = vsub.f32 %v1269, %v1435
    %v1512 = vsub.f32 %v1274, %v1437
    %v1513 = vsub.f32 %v1279, %v1439
    %v1514 = vsub.f32 %v1284, %v1441
    %v1515 = vsub.f32 %v1289, %v1443
    %v1516 = vsub.f32 %v1294, %v1445
    %v1517 = vsub.f32 %v1299, %v1447
    %v1518 = vsub.f32 %v1304, %v1449
    %v1519 = vsub.f32 %v1309, %v1451
    %v1520 = vsub.f32 %v1314, %v1453
    %v1521 = vsub.f32 %v1319, %v1455
    %v1522 = vsub.f32 %v1324, %v1457
    %v1523 = vsub.f32 %v1329, %v1459
    %v1524 = vmul.f32 %v1460, 1.442695
    %v1525 = vpow.pop %v1524
    %v1526 = vmul.f32 %v1461, 1.442695
    %v1527 = vpow.pop %v1526
    %v1528 = vmul.f32 %v1462, 1.442695
    %v1529 = vpow.pop %v1528
    %v1530 = vmul.f32 %v1463, 1.442695
    %v1531 = vpow.pop %v1530
    %v1532 = vmul.f32 %v1464, 1.442695
    %v1533 = vpow.pop %v1532
    %v1534 = vmul.f32 %v1465, 1.442695
    %v1535 = vpow.pop %v1534
    %v1536 = vmul.f32 %v1466, 1.442695
    %v1537 = vpow.pop %v1536
    %v1538 = vmul.f32 %v1467, 1.442695
    %v1539 = vpow.pop %v1538
    %v1540 = vmul.f32 %v1468, 1.442695
    %v1541 = vpow.pop %v1540
    %v1542 = vmul.f32 %v1469, 1.442695
    %v1543 = vpow.pop %v1542
    %v1544 = vmul.f32 %v1470, 1.442695
    %v1545 = vpow.pop %v1544
    %v1546 = vmul.f32 %v1471, 1.442695
    %v1547 = vpow.pop %v1546
    %v1548 = vmul.f32 %v1472, 1.442695
    %v1549 = vpow.pop %v1548
    %v1550 = vmul.f32 %v1473, 1.442695
    %v1551 = vpow.pop %v1550
    %v1552 = vmul.f32 %v1474, 1.442695
    %v1553 = vpow.pop %v1552
    %v1554 = vmul.f32 %v1475, 1.442695
    %v1555 = vpow.pop %v1554
    %v1556 = vmul.f32 %v1476, 1.442695
    %v1557 = vpow.pop %v1556
    %v1558 = vmul.f32 %v1477, 1.442695
    %v1559 = vpow.pop %v1558
    %v1560 = vmul.f32 %v1478, 1.442695
    %v1561 = vpow.pop %v1560
    %v1562 = vmul.f32 %v1479, 1.442695
    %v1563 = vpow.pop %v1562
    %v1564 = vmul.f32 %v1480, 1.442695
    %v1565 = vpow.pop %v1564
    %v1566 = vmul.f32 %v1481, 1.442695
    %v1567 = vpow.pop %v1566
    %v1568 = vmul.f32 %v1482, 1.442695
    %v1569 = vpow.pop %v1568
    %v1570 = vmul.f32 %v1483, 1.442695
    %v1571 = vpow.pop %v1570
    %v1572 = vmul.f32 %v1484, 1.442695
    %v1573 = vpow.pop %v1572
    %v1574 = vmul.f32 %v1485, 1.442695
    %v1575 = vpow.pop %v1574
    %v1576 = vmul.f32 %v1486, 1.442695
    %v1577 = vpow.pop %v1576
    %v1578 = vmul.f32 %v1487, 1.442695
    %v1579 = vpow.pop %v1578
    %v1580 = vmul.f32 %v1488, 1.442695
    %v1581 = vpow.pop %v1580
    %v1582 = vmul.f32 %v1489, 1.442695
    %v1583 = vpow.pop %v1582
    %v1584 = vmul.f32 %v1490, 1.442695
    %v1585 = vpow.pop %v1584
    %v1586 = vmul.f32 %v1491, 1.442695
    %v1587 = vpow.pop %v1586
    %v1588 = vmul.f32 %v1492, 1.442695
    %v1589 = vpow.pop %v1588
    %v1590 = vmul.f32 %v1493, 1.442695
    %v1591 = vpow.pop %v1590
    %v1592 = vmul.f32 %v1494, 1.442695
    %v1593 = vpow.pop %v1592
    %v1594 = vmul.f32 %v1495, 1.442695
    %v1595 = vpow.pop %v1594
    %v1596 = vmul.f32 %v1496, 1.442695
    %v1597 = vpow.pop %v1596
    %v1598 = vmul.f32 %v1497, 1.442695
    %v1599 = vpow.pop %v1598
    %v1600 = vmul.f32 %v1498, 1.442695
    %v1601 = vpow.pop %v1600
    %v1602 = vmul.f32 %v1499, 1.442695
    %v1603 = vpow.pop %v1602
    %v1604 = vmul.f32 %v1500, 1.442695
    %v1605 = vpow.pop %v1604
    %v1606 = vmul.f32 %v1501, 1.442695
    %v1607 = vpow.pop %v1606
    %v1608 = vmul.f32 %v1502, 1.442695
    %v1609 = vpow.pop %v1608
    %v1610 = vmul.f32 %v1503, 1.442695
    %v1611 = vpow.pop %v1610
    %v1612 = vmul.f32 %v1504, 1.442695
    %v1613 = vpow.pop %v1612
    %v1614 = vmul.f32 %v1505, 1.442695
    %v1615 = vpow.pop %v1614
    %v1616 = vmul.f32 %v1506, 1.442695
    %v1617 = vpow.pop %v1616
    %v1618 = vmul.f32 %v1507, 1.442695
    %v1619 = vpow.pop %v1618
    %v1620 = vmul.f32 %v1508, 1.442695
    %v1621 = vpow.pop %v1620
    %v1622 = vmul.f32 %v1509, 1.442695
    %v1623 = vpow.pop %v1622
    %v1624 = vmul.f32 %v1510, 1.442695
    %v1625 = vpow.pop %v1624
    %v1626 = vmul.f32 %v1511, 1.442695
    %v1627 = vpow.pop %v1626
    %v1628 = vmul.f32 %v1512, 1.442695
    %v1629 = vpow.pop %v1628
    %v1630 = vmul.f32 %v1513, 1.442695
    %v1631 = vpow.pop %v1630
    %v1632 = vmul.f32 %v1514, 1.442695
    %v1633 = vpow.pop %v1632
    %v1634 = vmul.f32 %v1515, 1.442695
    %v1635 = vpow.pop %v1634
    %v1636 = vmul.f32 %v1516, 1.442695
    %v1637 = vpow.pop %v1636
    %v1638 = vmul.f32 %v1517, 1.442695
    %v1639 = vpow.pop %v1638
    %v1640 = vmul.f32 %v1518, 1.442695
    %v1641 = vpow.pop %v1640
    %v1642 = vmul.f32 %v1519, 1.442695
    %v1643 = vpow.pop %v1642
    %v1644 = vmul.f32 %v1520, 1.442695
    %v1645 = vpow.pop %v1644
    %v1646 = vmul.f32 %v1521, 1.442695
    %v1647 = vpow.pop %v1646
    %v1648 = vmul.f32 %v1522, 1.442695
    %v1649 = vpow.pop %v1648
    %v1650 = vmul.f32 %v1523, 1.442695
    %v1651 = vpow.pop %v1650
    %v1652 = vmul.f32 %v1525, %v28
    %v1653 = vmul.f32 %v1527, %v29
    %v1654 = vmul.f32 %v1529, %v30
    %v1655 = vmul.f32 %v1531, %v31
    %v1656 = vmul.f32 %v1533, %v32
    %v1657 = vmul.f32 %v1535, %v33
    %v1658 = vmul.f32 %v1537, %v34
    %v1659 = vmul.f32 %v1539, %v35
    %v1660 = vmul.f32 %v1541, %v36
    %v1661 = vmul.f32 %v1543, %v37
    %v1662 = vmul.f32 %v1545, %v38
    %v1663 = vmul.f32 %v1547, %v39
    %v1664 = vmul.f32 %v1549, %v40
    %v1665 = vmul.f32 %v1551, %v41
    %v1666 = vmul.f32 %v1553, %v42
    %v1667 = vmul.f32 %v1555, %v43
    %v1668 = vmul.f32 %v1557, %v28
    %v1669 = vmul.f32 %v1559, %v29
    %v1670 = vmul.f32 %v1561, %v30
    %v1671 = vmul.f32 %v1563, %v31
    %v1672 = vmul.f32 %v1565, %v32
    %v1673 = vmul.f32 %v1567, %v33
    %v1674 = vmul.f32 %v1569, %v34
    %v1675 = vmul.f32 %v1571, %v35
    %v1676 = vmul.f32 %v1573, %v36
    %v1677 = vmul.f32 %v1575, %v37
    %v1678 = vmul.f32 %v1577, %v38
    %v1679 = vmul.f32 %v1579, %v39
    %v1680 = vmul.f32 %v1581, %v40
    %v1681 = vmul.f32 %v1583, %v41
    %v1682 = vmul.f32 %v1585, %v42
    %v1683 = vmul.f32 %v1587, %v43
    %v1684 = vmul.f32 %v1589, %v28
    %v1685 = vmul.f32 %v1591, %v29
    %v1686 = vmul.f32 %v1593, %v30
    %v1687 = vmul.f32 %v1595, %v31
    %v1688 = vmul.f32 %v1597, %v32
    %v1689 = vmul.f32 %v1599, %v33
    %v1690 = vmul.f32 %v1601, %v34
    %v1691 = vmul.f32 %v1603, %v35
    %v1692 = vmul.f32 %v1605, %v36
    %v1693 = vmul.f32 %v1607, %v37
    %v1694 = vmul.f32 %v1609, %v38
    %v1695 = vmul.f32 %v1611, %v39
    %v1696 = vmul.f32 %v1613, %v40
    %v1697 = vmul.f32 %v1615, %v41
    %v1698 = vmul.f32 %v1617, %v42
    %v1699 = vmul.f32 %v1619, %v43
    %v1700 = vmul.f32 %v1621, %v28
    %v1701 = vmul.f32 %v1623, %v29
    %v1702 = vmul.f32 %v1625, %v30
    %v1703 = vmul.f32 %v1627, %v31
    %v1704 = vmul.f32 %v1629, %v32
    %v1705 = vmul.f32 %v1631, %v33
    %v1706 = vmul.f32 %v1633, %v34
    %v1707 = vmul.f32 %v1635, %v35
    %v1708 = vmul.f32 %v1637, %v36
    %v1709 = vmul.f32 %v1639, %v37
    %v1710 = vmul.f32 %v1641, %v38
    %v1711 = vmul.f32 %v1643, %v39
    %v1712 = vmul.f32 %v1645, %v40
    %v1713 = vmul.f32 %v1647, %v41
    %v1714 = vmul.f32 %v1649, %v42
    %v1715 = vmul.f32 %v1651, %v43
    %1716 = vmatprep.subr.mxu0 0.0
    %1717 = vmatpush1.xpose.msra.mxu0 %v1652
    %1718 = vmatprep.subr.mxu0 0.0
    %1719 = vmatpush1.xpose.msra.mxu0 %v1653
    %1720 = vmatprep.subr.mxu0 0.0
    %1721 = vmatpush1.xpose.msra.mxu0 %v1654
    %1722 = vmatprep.subr.mxu0 0.0
    %1723 = vmatpush1.xpose.msra.mxu0 %v1655
    %1724 = vmatprep.subr.mxu0 0.0
    %1725 = vmatpush1.xpose.msra.mxu0 %v1656
    %1726 = vmatprep.subr.mxu0 0.0
    %1727 = vmatpush1.xpose.msra.mxu0 %v1657
    %1728 = vmatprep.subr.mxu0 0.0
    %1729 = vmatpush1.xpose.msra.mxu0 %v1658
    %1730 = vmatprep.subr.mxu0 0.0
    %1731 = vmatpush1.xpose.msra.mxu0 %v1659
    %1732 = vmatprep.subr.mxu0 0.0
    %1733 = vmatpush1.xpose.msra.mxu0 %v1660
    %1734 = vmatprep.subr.mxu0 0.0
    %1735 = vmatpush1.xpose.msra.mxu0 %v1661
    %1736 = vmatprep.subr.mxu0 0.0
    %1737 = vmatpush1.xpose.msra.mxu0 %v1662
    %1738 = vmatprep.subr.mxu0 0.0
    %1739 = vmatpush1.xpose.msra.mxu0 %v1663
    %1740 = vmatprep.subr.mxu0 0.0
    %1741 = vmatpush1.xpose.msra.mxu0 %v1664
    %1742 = vmatprep.subr.mxu0 0.0
    %1743 = vmatpush1.xpose.msra.mxu0 %v1665
    %1744 = vmatprep.subr.mxu0 0.0
    %1745 = vmatpush1.xpose.msra.mxu0 %v1666
    %1746 = vmatprep.subr.mxu0 0.0
    %1747 = vmatpush1.xpose.msra.mxu0 %v1667
    %1748 = vmatprep.subr.mxu0 0.0
    %1749 = vmatpush1.xpose.msra.mxu0 0.0
    %1750 = vmatprep.subr.mxu0 0.0
    %1751 = vmatpush1.xpose.msra.mxu0 0.0
    %1752 = vmatprep.subr.mxu0 0.0
    %1753 = vmatpush1.xpose.msra.mxu0 0.0
    %1754 = vmatprep.subr.mxu0 0.0
    %1755 = vmatpush1.xpose.msra.mxu0 0.0
    %1756 = vmatprep.subr.mxu0 0.0
    %1757 = vmatpush1.xpose.msra.mxu0 0.0
    %1758 = vmatprep.subr.mxu0 0.0
    %1759 = vmatpush1.xpose.msra.mxu0 0.0
    %1760 = vmatprep.subr.mxu0 0.0
    %1761 = vmatpush1.xpose.msra.mxu0 0.0
    %1762 = vmatprep.subr.mxu0 0.0
    %1763 = vmatpush1.xpose.msra.mxu0 0.0
    %1764 = vmatprep.subr.mxu0 0.0
    %1765 = vmatpush1.xpose.msra.mxu0 0.0
    %1766 = vmatprep.subr.mxu0 0.0
    %1767 = vmatpush1.xpose.msra.mxu0 0.0
    %1768 = vmatprep.subr.mxu0 0.0
    %1769 = vmatpush1.xpose.msra.mxu0 0.0
    %1770 = vmatprep.subr.mxu0 0.0
    %1771 = vmatpush1.xpose.msra.mxu0 0.0
    %1772 = vmatprep.subr.mxu0 0.0
    %1773 = vmatpush1.xpose.msra.mxu0 0.0
    %1774 = vmatprep.subr.mxu0 0.0
    %1775 = vmatpush1.xpose.msra.mxu0 0.0
    %1776 = vmatprep.subr.mxu0 0.0
    %1777 = vmatpush1.xpose.msra.mxu0 0.0
    %1778 = vmatprep.subr.mxu0 0.0
    %1779 = vmatpush1.xpose.msra.mxu0 0.0
    %1780 = vmatprep.mubr.f32.mxu0 0.0
    %1781 = vmatmul.mubr.f32.gmra.mrb[0].mxu0 %v383
    %v1782 = vpop.f32.mrb[0].mxu0
    %v1783 = vadd.f32 0.0, %v1782
    %v1784 = vpop.f32.mrb[0].mxu0
    %1785 = vmatprep.mubr.f32.mxu0 0.0
    %1786 = vmatmul.mubr.f32.gmra.mrb[0].mxu0 1.0
    %v1787 = vpop.f32.mrb[0].mxu0
    %v1788 = vadd.f32 0.0, %v1787
    %v1789 = vpop.f32.mrb[0].mxu0
    %1790 = vdwg.mxu0
    %1791 = vmatprep.subr.mxu0 0.0
    %1792 = vmatpush1.xpose.msra.mxu0 %v1668
    %1793 = vmatprep.subr.mxu0 0.0
    %1794 = vmatpush1.xpose.msra.mxu0 %v1669
    %1795 = vmatprep.subr.mxu0 0.0
    %1796 = vmatpush1.xpose.msra.mxu0 %v1670
    %1797 = vmatprep.subr.mxu0 0.0
    %1798 = vmatpush1.xpose.msra.mxu0 %v1671
    %1799 = vmatprep.subr.mxu0 0.0
    %1800 = vmatpush1.xpose.msra.mxu0 %v1672
    %1801 = vmatprep.subr.mxu0 0.0
    %1802 = vmatpush1.xpose.msra.mxu0 %v1673
    %1803 = vmatprep.subr.mxu0 0.0
    %1804 = vmatpush1.xpose.msra.mxu0 %v1674
    %1805 = vmatprep.subr.mxu0 0.0
    %1806 = vmatpush1.xpose.msra.mxu0 %v1675
    %1807 = vmatprep.subr.mxu0 0.0
    %1808 = vmatpush1.xpose.msra.mxu0 %v1676
    %1809 = vmatprep.subr.mxu0 0.0
    %1810 = vmatpush1.xpose.msra.mxu0 %v1677
    %1811 = vmatprep.subr.mxu0 0.0
    %1812 = vmatpush1.xpose.msra.mxu0 %v1678
    %1813 = vmatprep.subr.mxu0 0.0
    %1814 = vmatpush1.xpose.msra.mxu0 %v1679
    %1815 = vmatprep.subr.mxu0 0.0
    %1816 = vmatpush1.xpose.msra.mxu0 %v1680
    %1817 = vmatprep.subr.mxu0 0.0
    %1818 = vmatpush1.xpose.msra.mxu0 %v1681
    %1819 = vmatprep.subr.mxu0 0.0
    %1820 = vmatpush1.xpose.msra.mxu0 %v1682
    %1821 = vmatprep.subr.mxu0 0.0
    %1822 = vmatpush1.xpose.msra.mxu0 %v1683
    %1823 = vmatprep.subr.mxu0 0.0
    %1824 = vmatpush1.xpose.msra.mxu0 0.0
    %1825 = vmatprep.subr.mxu0 0.0
    %1826 = vmatpush1.xpose.msra.mxu0 0.0
    %1827 = vmatprep.subr.mxu0 0.0
    %1828 = vmatpush1.xpose.msra.mxu0 0.0
    %1829 = vmatprep.subr.mxu0 0.0
    %1830 = vmatpush1.xpose.msra.mxu0 0.0
    %1831 = vmatprep.subr.mxu0 0.0
    %1832 = vmatpush1.xpose.msra.mxu0 0.0
    %1833 = vmatprep.subr.mxu0 0.0
    %1834 = vmatpush1.xpose.msra.mxu0 0.0
    %1835 = vmatprep.subr.mxu0 0.0
    %1836 = vmatpush1.xpose.msra.mxu0 0.0
    %1837 = vmatprep.subr.mxu0 0.0
    %1838 = vmatpush1.xpose.msra.mxu0 0.0
    %1839 = vmatprep.subr.mxu0 0.0
    %1840 = vmatpush1.xpose.msra.mxu0 0.0
    %1841 = vmatprep.subr.mxu0 0.0
    %1842 = vmatpush1.xpose.msra.mxu0 0.0
    %1843 = vmatprep.subr.mxu0 0.0
    %1844 = vmatpush1.xpose.msra.mxu0 0.0
    %1845 = vmatprep.subr.mxu0 0.0
    %1846 = vmatpush1.xpose.msra.mxu0 0.0
    %1847 = vmatprep.subr.mxu0 0.0
    %1848 = vmatpush1.xpose.msra.mxu0 0.0
    %1849 = vmatprep.subr.mxu0 0.0
    %1850 = vmatpush1.xpose.msra.mxu0 0.0
    %1851 = vmatprep.subr.mxu0 0.0
    %1852 = vmatpush1.xpose.msra.mxu0 0.0
    %1853 = vmatprep.subr.mxu0 0.0
    %1854 = vmatpush1.xpose.msra.mxu0 0.0
    %1855 = vmatprep.mubr.f32.mxu0 0.0
    %1856 = vmatmul.mubr.f32.gmra.mrb[0].mxu0 %v398
    %v1857 = vpop.f32.mrb[0].mxu0
    %v1858 = vadd.f32 0.0, %v1857
    %v1859 = vpop.f32.mrb[0].mxu0
    %1860 = vmatprep.mubr.f32.mxu0 0.0
    %1861 = vmatmul.mubr.f32.gmra.mrb[0].mxu0 1.0
    %v1862 = vpop.f32.mrb[0].mxu0
    %v1863 = vadd.f32 0.0, %v1862
    %v1864 = vpop.f32.mrb[0].mxu0
    %1865 = vdwg.mxu0
    %1866 = vmatprep.subr.mxu0 0.0
    %1867 = vmatpush1.xpose.msra.mxu0 %v1684
    %1868 = vmatprep.subr.mxu0 0.0
    %1869 = vmatpush1.xpose.msra.mxu0 %v1685
    %1870 = vmatprep.subr.mxu0 0.0
    %1871 = vmatpush1.xpose.msra.mxu0 %v1686
    %1872 = vmatprep.subr.mxu0 0.0
    %1873 = vmatpush1.xpose.msra.mxu0 %v1687
    %1874 = vmatprep.subr.mxu0 0.0
    %1875 = vmatpush1.xpose.msra.mxu0 %v1688
    %1876 = vmatprep.subr.mxu0 0.0
    %1877 = vmatpush1.xpose.msra.mxu0 %v1689
    %1878 = vmatprep.subr.mxu0 0.0
    %1879 = vmatpush1.xpose.msra.mxu0 %v1690
    %1880 = vmatprep.subr.mxu0 0.0
    %1881 = vmatpush1.xpose.msra.mxu0 %v1691
    %1882 = vmatprep.subr.mxu0 0.0
    %1883 = vmatpush1.xpose.msra.mxu0 %v1692
    %1884 = vmatprep.subr.mxu0 0.0
    %1885 = vmatpush1.xpose.msra.mxu0 %v1693
    %1886 = vmatprep.subr.mxu0 0.0
    %1887 = vmatpush1.xpose.msra.mxu0 %v1694
    %1888 = vmatprep.subr.mxu0 0.0
    %1889 = vmatpush1.xpose.msra.mxu0 %v1695
    %1890 = vmatprep.subr.mxu0 0.0
    %1891 = vmatpush1.xpose.msra.mxu0 %v1696
    %1892 = vmatprep.subr.mxu0 0.0
    %1893 = vmatpush1.xpose.msra.mxu0 %v1697
    %1894 = vmatprep.subr.mxu0 0.0
    %1895 = vmatpush1.xpose.msra.mxu0 %v1698
    %1896 = vmatprep.subr.mxu0 0.0
    %1897 = vmatpush1.xpose.msra.mxu0 %v1699
    %1898 = vmatprep.subr.mxu0 0.0
    %1899 = vmatpush1.xpose.msra.mxu0 0.0
    %1900 = vmatprep.subr.mxu0 0.0
    %1901 = vmatpush1.xpose.msra.mxu0 0.0
    %1902 = vmatprep.subr.mxu0 0.0
    %1903 = vmatpush1.xpose.msra.mxu0 0.0
    %1904 = vmatprep.subr.mxu0 0.0
    %1905 = vmatpush1.xpose.msra.mxu0 0.0
    %1906 = vmatprep.subr.mxu0 0.0
    %1907 = vmatpush1.xpose.msra.mxu0 0.0
    %1908 = vmatprep.subr.mxu0 0.0
    %1909 = vmatpush1.xpose.msra.mxu0 0.0
    %1910 = vmatprep.subr.mxu0 0.0
    %1911 = vmatpush1.xpose.msra.mxu0 0.0
    %1912 = vmatprep.subr.mxu0 0.0
    %1913 = vmatpush1.xpose.msra.mxu0 0.0
    %1914 = vmatprep.subr.mxu0 0.0
    %1915 = vmatpush1.xpose.msra.mxu0 0.0
    %1916 = vmatprep.subr.mxu0 0.0
    %1917 = vmatpush1.xpose.msra.mxu0 0.0
    %1918 = vmatprep.subr.mxu0 0.0
    %1919 = vmatpush1.xpose.msra.mxu0 0.0
    %1920 = vmatprep.subr.mxu0 0.0
    %1921 = vmatpush1.xpose.msra.mxu0 0.0
    %1922 = vmatprep.subr.mxu0 0.0
    %1923 = vmatpush1.xpose.msra.mxu0 0.0
    %1924 = vmatprep.subr.mxu0 0.0
    %1925 = vmatpush1.xpose.msra.mxu0 0.0
    %1926 = vmatprep.subr.mxu0 0.0
    %1927 = vmatpush1.xpose.msra.mxu0 0.0
    %1928 = vmatprep.subr.mxu0 0.0
    %1929 = vmatpush1.xpose.msra.mxu0 0.0
    %1930 = vmatprep.mubr.f32.mxu0 0.0
    %1931 = vmatmul.mubr.f32.gmra.mrb[0].mxu0 %v413
    %v1932 = vpop.f32.mrb[0].mxu0
    %v1933 = vadd.f32 0.0, %v1932
    %v1934 = vpop.f32.mrb[0].mxu0
    %1935 = vmatprep.mubr.f32.mxu0 0.0
    %1936 = vmatmul.mubr.f32.gmra.mrb[0].mxu0 1.0
    %v1937 = vpop.f32.mrb[0].mxu0
    %v1938 = vadd.f32 0.0, %v1937
    %v1939 = vpop.f32.mrb[0].mxu0
    %1940 = vdwg.mxu0
    %1941 = vmatprep.subr.mxu0 0.0
    %1942 = vmatpush1.xpose.msra.mxu0 %v1700
    %1943 = vmatprep.subr.mxu0 0.0
    %1944 = vmatpush1.xpose.msra.mxu0 %v1701
    %1945 = vmatprep.subr.mxu0 0.0
    %1946 = vmatpush1.xpose.msra.mxu0 %v1702
    %1947 = vmatprep.subr.mxu0 0.0
    %1948 = vmatpush1.xpose.msra.mxu0 %v1703
    %1949 = vmatprep.subr.mxu0 0.0
    %1950 = vmatpush1.xpose.msra.mxu0 %v1704
    %1951 = vmatprep.subr.mxu0 0.0
    %1952 = vmatpush1.xpose.msra.mxu0 %v1705
    %1953 = vmatprep.subr.mxu0 0.0
    %1954 = vmatpush1.xpose.msra.mxu0 %v1706
    %1955 = vmatprep.subr.mxu0 0.0
    %1956 = vmatpush1.xpose.msra.mxu0 %v1707
    %1957 = vmatprep.subr.mxu0 0.0
    %1958 = vmatpush1.xpose.msra.mxu0 %v1708
    %1959 = vmatprep.subr.mxu0 0.0
    %1960 = vmatpush1.xpose.msra.mxu0 %v1709
    %1961 = vmatprep.subr.mxu0 0.0
    %1962 = vmatpush1.xpose.msra.mxu0 %v1710
    %1963 = vmatprep.subr.mxu0 0.0
    %1964 = vmatpush1.xpose.msra.mxu0 %v1711
    %1965 = vmatprep.subr.mxu0 0.0
    %1966 = vmatpush1.xpose.msra.mxu0 %v1712
    %1967 = vmatprep.subr.mxu0 0.0
    %1968 = vmatpush1.xpose.msra.mxu0 %v1713
    %1969 = vmatprep.subr.mxu0 0.0
    %1970 = vmatpush1.xpose.msra.mxu0 %v1714
    %1971 = vmatprep.subr.mxu0 0.0
    %1972 = vmatpush1.xpose.msra.mxu0 %v1715
    %1973 = vmatprep.subr.mxu0 0.0
    %1974 = vmatpush1.xpose.msra.mxu0 0.0
    %1975 = vmatprep.subr.mxu0 0.0
    %1976 = vmatpush1.xpose.msra.mxu0 0.0
    %1977 = vmatprep.subr.mxu0 0.0
    %1978 = vmatpush1.xpose.msra.mxu0 0.0
    %1979 = vmatprep.subr.mxu0 0.0
    %1980 = vmatpush1.xpose.msra.mxu0 0.0
    %1981 = vmatprep.subr.mxu0 0.0
    %1982 = vmatpush1.xpose.msra.mxu0 0.0
    %1983 = vmatprep.subr.mxu0 0.0
    %1984 = vmatpush1.xpose.msra.mxu0 0.0
    %1985 = vmatprep.subr.mxu0 0.0
    %1986 = vmatpush1.xpose.msra.mxu0 0.0
    %1987 = vmatprep.subr.mxu0 0.0
    %1988 = vmatpush1.xpose.msra.mxu0 0.0
    %1989 = vmatprep.subr.mxu0 0.0
    %1990 = vmatpush1.xpose.msra.mxu0 0.0
    %1991 = vmatprep.subr.mxu0 0.0
    %1992 = vmatpush1.xpose.msra.mxu0 0.0
    %1993 = vmatprep.subr.mxu0 0.0
    %1994 = vmatpush1.xpose.msra.mxu0 0.0
    %1995 = vmatprep.subr.mxu0 0.0
    %1996 = vmatpush1.xpose.msra.mxu0 0.0
    %1997 = vmatprep.subr.mxu0 0.0
    %1998 = vmatpush1.xpose.msra.mxu0 0.0
    %1999 = vmatprep.subr.mxu0 0.0
    %2000 = vmatpush1.xpose.msra.mxu0 0.0
    %2001 = vmatprep.subr.mxu0 0.0
    %2002 = vmatpush1.xpose.msra.mxu0 0.0
    %2003 = vmatprep.subr.mxu0 0.0
    %2004 = vmatpush1.xpose.msra.mxu0 0.0
    %2005 = vmatprep.mubr.f32.mxu0 0.0
    %2006 = vmatmul.mubr.f32.gmra.mrb[0].mxu0 %v428
    %v2007 = vpop.f32.mrb[0].mxu0
    %v2008 = vadd.f32 0.0, %v2007
    %v2009 = vpop.f32.mrb[0].mxu0
    %2010 = vmatprep.mubr.f32.mxu0 0.0
    %2011 = vmatmul.mubr.f32.gmra.mrb[0].mxu0 1.0
    %v2012 = vpop.f32.mrb[0].mxu0
    %v2013 = vadd.f32 0.0, %v2012
    %v2014 = vpop.f32.mrb[0].mxu0
    %2015 = vdwg.mxu0
    %v2016 = vrcp.pop %v1788
    %v2017 = vrcp.pop %v1863
    %v2018 = vrcp.pop %v1938
    %v2019 = vrcp.pop %v2013
    %v2020 = vlaneseq
    %v2021 = vshrl.u32 %v2020, 7
    %v2022 = vsub.s32 0, %v2021
    %v2023 = vrot.slane %v2016, %v2022
    %v2024 = vlaneseq
    %v2025 = vshrl.u32 %v2024, 7
    %v2026 = vsub.s32 0, %v2025
    %v2027 = vrot.slane %v2017, %v2026
    %v2028 = vlaneseq
    %v2029 = vshrl.u32 %v2028, 7
    %v2030 = vsub.s32 0, %v2029
    %v2031 = vrot.slane %v2018, %v2030
    %v2032 = vlaneseq
    %v2033 = vshrl.u32 %v2032, 7
    %v2034 = vsub.s32 0, %v2033
    %v2035 = vrot.slane %v2019, %v2034
    %v2036 = vmul.f32 %v1783, %v2023
    %v2037 = vmul.f32 %v1858, %v2027
    %v2038 = vmul.f32 %v1933, %v2031
    %v2039 = vmul.f32 %v2008, %v2035
    %v2040 = vld [vmem:[%s3] sm:$0xff]
    %v2041 = vld [vmem:[%s3 + $0x8] sm:$0xff]
    %v2042 = vld [vmem:[%s3 + $0x10] sm:$0xff]
    %v2043 = vld [vmem:[%s3 + $0x18] sm:$0xff]
    %v2044 = vld [vmem:[%s4] sm:$0xff]
    %v2045 = vld [vmem:[%s4 + $0x8] sm:$0xff]
    %v2046 = vld [vmem:[%s4 + $0x10] sm:$0xff]
    %v2047 = vld [vmem:[%s4 + $0x18] sm:$0xff]
    %2049 = vset.pattern.permute.xlu0 0
    %2050 = vperm.xlu0 %2049, %v2044
    %v2051 = vpop.permute.xlu0 %2050
    %2054 = vset.pattern.permute.xlu0 0
    %2055 = vperm.xlu0 %2054, %v2045
    %v2056 = vpop.permute.xlu0 %2055
    %2059 = vset.pattern.permute.xlu0 0
    %2060 = vperm.xlu0 %2059, %v2046
    %v2061 = vpop.permute.xlu0 %2060
    %2064 = vset.pattern.permute.xlu0 0
    %2065 = vperm.xlu0 %2064, %v2047
    %v2066 = vpop.permute.xlu0 %2065
    %v2069 = vsel %vm269, %v2040, 0
    %v2072 = vsel %vm269, %v2041, 0
    %v2075 = vsel %vm269, %v2042, 0
    %v2078 = vsel %vm269, %v2043, 0
    %2080 = vmatprep.subr.mxu0 0.0
    %2081 = vmatpush1.msra.mxu0 %v2036
    %2082 = vmatprep.subr.mxu0 0.0
    %2083 = vmatpush1.msra.mxu0 %v2037
    %2084 = vmatprep.subr.mxu0 0.0
    %2085 = vmatpush1.msra.mxu0 %v2038
    %2086 = vmatprep.subr.mxu0 0.0
    %2087 = vmatpush1.msra.mxu0 %v2039
    %2088 = vmatprep.subr.mxu0 0.0
    %2089 = vmatpush1.msra.mxu0 0.0
    %2090 = vmatprep.subr.mxu0 0.0
    %2091 = vmatpush1.msra.mxu0 0.0
    %2092 = vmatprep.subr.mxu0 0.0
    %2093 = vmatpush1.msra.mxu0 0.0
    %2094 = vmatprep.subr.mxu0 0.0
    %2095 = vmatpush1.msra.mxu0 0.0
    %2096 = vmatprep.subr.mxu0 0.0
    %2097 = vmatpush1.msra.mxu0 0.0
    %2098 = vmatprep.subr.mxu0 0.0
    %2099 = vmatpush1.msra.mxu0 0.0
    %2100 = vmatprep.subr.mxu0 0.0
    %2101 = vmatpush1.msra.mxu0 0.0
    %2102 = vmatprep.subr.mxu0 0.0
    %2103 = vmatpush1.msra.mxu0 0.0
    %2104 = vmatprep.subr.mxu0 0.0
    %2105 = vmatpush1.msra.mxu0 0.0
    %2106 = vmatprep.subr.mxu0 0.0
    %2107 = vmatpush1.msra.mxu0 0.0
    %2108 = vmatprep.subr.mxu0 0.0
    %2109 = vmatpush1.msra.mxu0 0.0
    %2110 = vmatprep.subr.mxu0 0.0
    %2111 = vmatpush1.msra.mxu0 0.0
    %2112 = vmatprep.subr.mxu0 0.0
    %2113 = vmatpush1.msra.mxu0 0.0
    %2114 = vmatprep.subr.mxu0 0.0
    %2115 = vmatpush1.msra.mxu0 0.0
    %2116 = vmatprep.subr.mxu0 0.0
    %2117 = vmatpush1.msra.mxu0 0.0
    %2118 = vmatprep.subr.mxu0 0.0
    %2119 = vmatpush1.msra.mxu0 0.0
    %2120 = vmatprep.subr.mxu0 0.0
    %2121 = vmatpush1.msra.mxu0 0.0
    %2122 = vmatprep.subr.mxu0 0.0
    %2123 = vmatpush1.msra.mxu0 0.0
    %2124 = vmatprep.subr.mxu0 0.0
    %2125 = vmatpush1.msra.mxu0 0.0
    %2126 = vmatprep.subr.mxu0 0.0
    %2127 = vmatpush1.msra.mxu0 0.0
    %2128 = vmatprep.subr.mxu0 0.0
    %2129 = vmatpush1.msra.mxu0 0.0
    %2130 = vmatprep.subr.mxu0 0.0
    %2131 = vmatpush1.msra.mxu0 0.0
    %2132 = vmatprep.subr.mxu0 0.0
    %2133 = vmatpush1.msra.mxu0 0.0
    %2134 = vmatprep.subr.mxu0 0.0
    %2135 = vmatpush1.msra.mxu0 0.0
    %2136 = vmatprep.subr.mxu0 0.0
    %2137 = vmatpush1.msra.mxu0 0.0
    %2138 = vmatprep.subr.mxu0 0.0
    %2139 = vmatpush1.msra.mxu0 0.0
    %2140 = vmatprep.subr.mxu0 0.0
    %2141 = vmatpush1.msra.mxu0 0.0
    %2142 = vmatprep.subr.mxu0 0.0
    %2143 = vmatpush1.msra.mxu0 0.0
    %2144 = vmatprep.mubr.f32.mxu0 0.0
    %2145 = vmatmul.mubr.f32.gmra.mrb[0].mxu0 %v2069
    %v2146 = vpop.f32.mrb[0].mxu0
    %v2147 = vadd.f32 %v2051, %v2146
    %v2148 = vpop.f32.mrb[0].mxu0
    %2149 = vmatprep.mubr.f32.mxu0 0.0
    %2150 = vmatmul.mubr.f32.gmra.mrb[0].mxu0 %v2072
    %v2151 = vpop.f32.mrb[0].mxu0
    %v2152 = vadd.f32 %v2056, %v2151
    %v2153 = vpop.f32.mrb[0].mxu0
    %2154 = vmatprep.mubr.f32.mxu0 0.0
    %2155 = vmatmul.mubr.f32.gmra.mrb[0].mxu0 %v2075
    %v2156 = vpop.f32.mrb[0].mxu0
    %v2157 = vadd.f32 %v2061, %v2156
    %v2158 = vpop.f32.mrb[0].mxu0
    %2159 = vmatprep.mubr.f32.mxu0 0.0
    %2160 = vmatmul.mubr.f32.gmra.mrb[0].mxu0 %v2078
    %v2161 = vpop.f32.mrb[0].mxu0
    %v2162 = vadd.f32 %v2066, %v2161
    %v2163 = vpop.f32.mrb[0].mxu0
    %2164 = vdwg.mxu0
    %v2165 = vadd.f32 %v24, %v2147
    %v2166 = vadd.f32 %v25, %v2152
    %v2167 = vadd.f32 %v26, %v2157
    %v2168 = vadd.f32 %v27, %v2162
    %2169 = vst [vmem:[#allocation2] sm:$0xff] %v2165
    %2170 = vst [vmem:[#allocation2 + $0x8] sm:$0xff] %v2166
    %2171 = vst [vmem:[#allocation2 + $0x10] sm:$0xff] %v2167
    %2172 = vst [vmem:[#allocation2 + $0x18] sm:$0xff] %v2168
    // Predicated region
    $region26: #{tpu_custom_call.1} parent=1 // pred_check
      _
    $region27: #{tpu_custom_call.1} parent=1 // pred_check_branch
      %2174 = sbr.rel (0) target = $region29
    $region28: #{tpu_custom_call.1} parent=1 // pred_region
      %s2176 = ssub.s32 512, 512
      %2177 = vsyncadd [#allocation3], %s2176
      %s2178 = sshll.u32 [#allocation2], 4
      %s2179 = int_to_ptr.vmem [resolvable:$true] %s2178
      %2184 = dma.vmem_to_hbm [thread:$0]  %s2179, 512, %s6, [#allocation3], 128, 128, 8
    $region29: #{tpu_custom_call.1} parent=1 // pred_fallthru
      _
    // Predicated region
    $region30: #{tpu_custom_call.1} parent=1 // pred_check
      _
    $region31: #{tpu_custom_call.1} parent=1 // pred_check_branch
      %2186 = sbr.rel (0) target = $region33
    $region32: #{tpu_custom_call.1} parent=1 // pred_region
      %2187 = dma.done [#allocation3], 512
    $region33: #{tpu_custom_call.1} parent=1 // pred_fallthru
      _
    %2188 = vsyncpa [#allocation3], 1

</llo_original>
